<compile_context>
chip_gen: v7x
topology: tpu7x:2x2x1
jax: 0.10.0
libtpu: 0.0.40
codegen_flags: <defaults>
</compile_context>

<pallas_src>
import functools

import jax
import jax.numpy as jnp
import numpy as np
from jax import lax
from jax.experimental import pallas as pl
from jax.experimental.pallas import tpu as pltpu

MATMUL_DTYPE = jnp.bfloat16   # MXU operand dtype; accumulation stays f32


# ----------------------------------------------------------------------------
# Pallas kernels
# ----------------------------------------------------------------------------
def _bilstm_layer_kernel(x_ref, wih_ref, whh_ref, b_ref, out_ref,
                         pre_scr, out_scr, *, L, B, H):
    """One bidirectional LSTM layer.

    grid=(2,): program 0 = forward direction, program 1 = backward direction.
    x_ref:   (L*B, Din)  bf16, time-major rows (row = t*B + b)
    wih_ref: (Din, 4H)   bf16 (this direction)
    whh_ref: (H, 4H)     bf16 (this direction)
    b_ref:   (1, 4H)     f32  (b_ih + b_hh, this direction)
    out_ref: (L*B, H)    bf16 (this direction's lane-half of the layer output)
    pre_scr: (L*B, 4H)   f32 VMEM  — hoisted input-projection slab
    out_scr: (L*B, H)    f32 VMEM  — per-direction output slab
    """
    d = pl.program_id(0)                       # 0 = fwd, 1 = bwd

    # ---- hoisted input projection for ALL timesteps: one big MXU matmul ----
    pre_scr[...] = (jnp.dot(x_ref[...], wih_ref[...],
                            preferred_element_type=jnp.float32)
                    + b_ref[...])              # (L*B, 4H) f32

    whh = whh_ref[...]                         # keep resident across the loop

    def step(t, carry):
        h, c = carry                           # (B, H) f32 each, live in vregs
        t_eff = jnp.where(d == 0, t, L - 1 - t)
        row = pl.multiple_of(t_eff * B, B)

        gates = (pre_scr[pl.ds(row, B), :]
                 + jnp.dot(h.astype(MATMUL_DTYPE), whh,
                           preferred_element_type=jnp.float32))   # (B, 4H) f32

        # H % 128 == 0 => each gate slice is whole 128-lane vregs (no XLU work)
        i = jax.nn.sigmoid(gates[:, 0 * H:1 * H])
        f = jax.nn.sigmoid(gates[:, 1 * H:2 * H])
        g = jnp.tanh(gates[:, 2 * H:3 * H])
        o = jax.nn.sigmoid(gates[:, 3 * H:4 * H])

        c_new = f * c + i * g
        h_new = o * jnp.tanh(c_new)
        out_scr[pl.ds(row, B), :] = h_new      # f32, sublane-aligned store
        return (h_new, c_new)

    h0 = jnp.zeros((B, H), jnp.float32)
    c0 = jnp.zeros((B, H), jnp.float32)
    lax.fori_loop(0, L, step, (h0, c0), unroll=True)

    # single lane-dense writeback of the whole (L*B, H) direction output
    out_ref[...] = out_scr[...].astype(out_ref.dtype)


def bilstm_layer(x2d, wih, whh, b, *, L, B, H):
    """x2d: (L*B, Din) bf16 time-major.  Returns (L*B, 2H) bf16 (fwd | bwd)."""
    LB, Din = x2d.shape
    assert LB == L * B
    assert H % 128 == 0, "H must be a multiple of 128 (pad weights if needed)"

    kernel = functools.partial(_bilstm_layer_kernel, L=L, B=B, H=H)
    return pl.pallas_call(
        kernel,
        out_shape=jax.ShapeDtypeStruct((LB, 2 * H), x2d.dtype),
        grid=(2,),                                              # directions
        in_specs=[
            pl.BlockSpec((LB, Din), lambda d: (0, 0)),          # x (shared)
            pl.BlockSpec((None, Din, 4 * H), lambda d: (d, 0, 0)),  # W_ih^T
            pl.BlockSpec((None, H, 4 * H), lambda d: (d, 0, 0)),    # W_hh^T
            pl.BlockSpec((None, 1, 4 * H), lambda d: (d, 0, 0)),    # bias
        ],
        # each direction writes its own lane-aligned half of the fused output
        out_specs=pl.BlockSpec((LB, H), lambda d: (0, d)),
        scratch_shapes=[pltpu.VMEM((LB, 4 * H), jnp.float32),   # preact slab
                        pltpu.VMEM((LB, H), jnp.float32)],      # out slab
        compiler_params=pltpu.CompilerParams(
            dimension_semantics=("parallel",)),   # v7x: fwd/bwd on separate TCs
    )(x2d, wih, whh, b)


def _fc_kernel(z_ref, w_ref, b_ref, o_ref):
    o_ref[...] = (jnp.dot(z_ref[...], w_ref[...],
                          preferred_element_type=jnp.float32)
                  + b_ref[...])


def fc_apply(z, w_big, b_pad):
    """z: (B, 4H) bf16, w_big: (4H, Cpad) bf16, b_pad: (1, Cpad) f32."""
    M, K = z.shape
    N = w_big.shape[1]
    return pl.pallas_call(
        _fc_kernel,
        out_shape=jax.ShapeDtypeStruct((M, N), jnp.float32),
        grid=(1,),
        in_specs=[pl.BlockSpec((M, K), lambda i: (0, 0)),
                  pl.BlockSpec((K, N), lambda i: (0, 0)),
                  pl.BlockSpec((1, N), lambda i: (0, 0))],
        out_specs=pl.BlockSpec((M, N), lambda i: (0, 0)),
    )(z, w_big, b_pad)


# ----------------------------------------------------------------------------
# Model wrapper (glue in plain JAX)
# ----------------------------------------------------------------------------
def basic_lstm_forward(params, x, lengths):
    """Mirrors BasicLSTM.forward (pps=False, bidirectional=True, dropout=0).

    x: (N, L, D) float32, lengths: (N,) int32.  Returns (N, output_dim).
    """
    B, L, _ = x.shape
    H = params["lstm"][0]["whh"].shape[1]
    C = params["fc_b"].shape[-1]

    # time-major 2-D activations: row index = t*B + b  (lane-dense features)
    h2d = jnp.transpose(x, (1, 0, 2)).reshape(L * B, -1).astype(MATMUL_DTYPE)

    # 3 stacked bidirectional LSTM layers, zero h0/c0 (pps == False branch)
    for layer in params["lstm"]:
        h2d = bilstm_layer(h2d, layer["wih"], layer["whh"], layer["b"],
                           L=L, B=B, H=H)                      # (L*B, 2H)

    # dropout == 0 in the reference script, so no dropout is applied.

    # last_timestep gather moved BEFORE the FC (FC is linear, so identical):
    #   forward-half of fc(out) at t = length-1  uses h[length-1]
    #   backward-half of fc(out) at t = 0        uses h[0]
    idx_last = (lengths - 1) * B + jnp.arange(B)               # rows (len-1, b)
    h_last = h2d[idx_last]                                     # (B, 2H)
    h_first = h2d[:B]                                          # rows (0, b)
    z = jnp.concatenate([h_last, h_first], axis=-1)            # (B, 4H)

    out_pad = fc_apply(z, params["fc_w_big"], params["fc_b_pad"])  # (B, Cpad)
    return out_pad[:, :C]


# ----------------------------------------------------------------------------
# Deterministic parameter init (shapes follow nn.LSTM / nn.Linear)
# ----------------------------------------------------------------------------
def init_params(key, input_dim, rnn_size, output_dim, num_layers):
    H = rnn_size
    params = {"lstm": []}
    d_in = input_dim
    bound = 1.0 / np.sqrt(H)
    for _ in range(num_layers):
        wih, whh, bias = [], [], []
        for _dir in range(2):
            key, k1, k2, k3, k4 = jax.random.split(key, 5)
            w_ih = jax.random.uniform(k1, (4 * H, d_in), jnp.float32,
                                      -bound, bound)
            w_hh = jax.random.uniform(k2, (4 * H, H), jnp.float32,
                                      -bound, bound)
            b_ih = jax.random.uniform(k3, (4 * H,), jnp.float32, -bound, bound)
            b_hh = jax.random.uniform(k4, (4 * H,), jnp.float32, -bound, bound)
            wih.append(w_ih.T)                       # (d_in, 4H)
            whh.append(w_hh.T)                       # (H, 4H)
            bias.append((b_ih + b_hh).reshape(1, -1))
        params["lstm"].append({
            "wih": jnp.stack(wih).astype(MATMUL_DTYPE),   # (2, d_in, 4H)
            "whh": jnp.stack(whh).astype(MATMUL_DTYPE),   # (2, H, 4H)
            "b":   jnp.stack(bias),                        # (2, 1, 4H) f32
        })
        d_in = 2 * H

    key, k1, k2 = jax.random.split(key, 3)
    fb = 1.0 / np.sqrt(2 * H)
    fc_w = jax.random.uniform(k1, (output_dim, 2 * H), jnp.float32, -fb, fb)
    fc_b = jax.random.uniform(k2, (output_dim,), jnp.float32, -fb, fb)

    # block-diagonal FC weight for gather-before-FC, output padded to 128 lanes
    ds = output_dim // 2
    c_pad = ((output_dim + 127) // 128) * 128
    w_big = jnp.zeros((4 * H, c_pad), jnp.float32)
    w_big = w_big.at[:2 * H, :ds].set(fc_w.T[:, :ds])
    w_big = w_big.at[2 * H:, ds:output_dim].set(fc_w.T[:, ds:])
    b_pad = jnp.zeros((1, c_pad), jnp.float32).at[0, :output_dim].set(fc_b)

    params["fc_w_big"] = w_big.astype(MATMUL_DTYPE)   # (4H, Cpad) bf16
    params["fc_b_pad"] = b_pad                        # (1, Cpad) f32
    params["fc_w_t"] = fc_w.T.astype(MATMUL_DTYPE)    # (2H, C) bf16 (reference)
    params["fc_b"] = fc_b.reshape(1, -1)              # (1, C) f32
    return params


# ----------------------------------------------------------------------------
# Pure-JAX reference in the ORIGINAL structure (FC on all timesteps, then
# split/gather) with the same bf16 matmul operands — validates both numerics
# and the gather-before-FC / fused-direction restructuring.
# ----------------------------------------------------------------------------
def ref_forward(params, x, lengths):
    B, L, _ = x.shape
    H = params["lstm"][0]["whh"].shape[1]
    h = jnp.transpose(x, (1, 0, 2)).astype(MATMUL_DTYPE)       # (L, B, D)
    for layer in params["lstm"]:
        outs = []
        for d, reverse in ((0, False), (1, True)):
            wih, whh, b = layer["wih"][d], layer["whh"][d], layer["b"][d]
            pre = (jnp.dot(h, wih, preferred_element_type=jnp.float32)
                   + b)                                        # (L, B, 4H) f32
            hs = jnp.zeros((B, H), jnp.float32)
            cs = jnp.zeros((B, H), jnp.float32)
            out_dir = [None] * L
            order = range(L - 1, -1, -1) if reverse else range(L)
            for t in order:
                gates = pre[t] + jnp.dot(hs.astype(MATMUL_DTYPE), whh,
                                         preferred_element_type=jnp.float32)
                i = jax.nn.sigmoid(gates[:, 0 * H:1 * H])
                f = jax.nn.sigmoid(gates[:, 1 * H:2 * H])
                g = jnp.tanh(gates[:, 2 * H:3 * H])
                o = jax.nn.sigmoid(gates[:, 3 * H:4 * H])
                cs = f * cs + i * g
                hs = o * jnp.tanh(cs)
                out_dir[t] = hs.astype(MATMUL_DTYPE)
            outs.append(jnp.stack(out_dir))                    # (L, B, H)
        h = jnp.concatenate(outs, axis=-1)                     # (L, B, 2H)

    out = (jnp.dot(h, params["fc_w_t"], preferred_element_type=jnp.float32)
           + params["fc_b"])                                   # (L, B, C)
    out = out.transpose(1, 0, 2)                               # (B, L, C)
    C = out.shape[-1]
    ds = C // 2
    last_forward = out[:, :, :ds][jnp.arange(B), lengths - 1, :]
    last_backward = out[:, :, ds:][:, 0, :]
    return jnp.concatenate([last_forward, last_backward], axis=-1)


# ----------------------------------------------------------------------------
if __name__ == "__main__":
    # Small shapes consistent with the module's forward: x (N, L, D), lengths (N,)
    # B multiple of 8 (fills f32 sublanes), H multiple of 128 (lane-aligned gates).
    B, L, D = 8, 8, 16
    RNN_SIZE = 128
    NUM_LAYERS = 3
    OUTPUT_DIM = 10

    key = jax.random.PRNGKey(0)
    pkey, xkey = jax.random.split(key)
    params = init_params(pkey, D, RNN_SIZE, OUTPUT_DIM, NUM_LAYERS)

    x = jax.random.normal(xkey, (B, L, D), jnp.float32)
    lengths = jnp.array([8, 5, 3, 8, 6, 1, 7, 2], dtype=jnp.int32)

    out = jax.block_until_ready(basic_lstm_forward(params, x, lengths))
    ref = jax.block_until_ready(ref_forward(params, x, lengths))

    np.testing.assert_allclose(np.asarray(out, dtype=np.float32),
                               np.asarray(ref, dtype=np.float32),
                               rtol=2e-2, atol=2e-2)
    assert out.shape == (B, OUTPUT_DIM)

    # TODO(synk): for rnn_size not a multiple of 128 (e.g. the original 100),
    # zero-pad the hidden dimension to the next multiple of 128 (mathematically
    # identical since padded gate rows/cols are zero).
    print("KERNEL_OK")
</pallas_src>

<mosaic_0001>
module attributes {stable_mosaic.version = 11 : i64} {
  func.func @_bilstm_layer_kernel(%arg0: i32, %arg1: memref<64x16xbf16, #tpu.memory_space<vmem>>, %arg2: memref<1x16x512xbf16, #tpu.memory_space<vmem>>, %arg3: memref<1x128x512xbf16, #tpu.memory_space<vmem>>, %arg4: memref<1x1x512xf32, #tpu.memory_space<vmem>>, %arg5: memref<64x128xbf16, #tpu.memory_space<vmem>>, %arg6: memref<64x512xf32, #tpu.memory_space<vmem>>, %arg7: memref<64x128xf32, #tpu.memory_space<vmem>>) attributes {dimension_semantics = [#tpu.dimension_semantics<parallel>], iteration_bounds = array<i64: 2>, scalar_prefetch = 0 : i64, scratch_operands = 2 : i64, tpu.core_type = #tpu.core_type<tc>, window_params = [{pipeline_mode = #tpu.pipeline_mode<synchronous>, transform_indices = @transform_0, window_bounds = array<i64: 64, 16>}, {transform_indices = @transform_1, window_bounds = array<i64: 1, 16, 512>}, {transform_indices = @transform_2, window_bounds = array<i64: 1, 128, 512>}, {transform_indices = @transform_3, window_bounds = array<i64: 1, 1, 512>}, {transform_indices = @transform_4, window_bounds = array<i64: 64, 128>}]} {
    %c0 = arith.constant 0 : index
    %c0_0 = arith.constant 0 : index
    %0 = vector.load %arg1[%c0, %c0_0] : memref<64x16xbf16, #tpu.memory_space<vmem>>, vector<64x16xbf16>
    %c0_1 = arith.constant 0 : index
    %c0_2 = arith.constant 0 : index
    %c0_3 = arith.constant 0 : index
    %1 = vector.load %arg2[%c0_1, %c0_2, %c0_3] : memref<1x16x512xbf16, #tpu.memory_space<vmem>>, vector<1x16x512xbf16>
    %2 = vector.shape_cast %1 : vector<1x16x512xbf16> to vector<16x512xbf16>
    %cst = arith.constant dense<0.000000e+00> : vector<64x512xf32>
    %3 = tpu.matmul %0, %2, %cst {dimension_numbers = #tpu.dot_dimension_numbers<[1], [0], [0], [1], [0, 0, 1, 1], [], []>} : vector<64x16xbf16>, vector<16x512xbf16>, vector<64x512xf32> -> vector<64x512xf32>
    %c0_4 = arith.constant 0 : index
    %c0_5 = arith.constant 0 : index
    %c0_6 = arith.constant 0 : index
    %4 = vector.load %arg4[%c0_4, %c0_5, %c0_6] : memref<1x1x512xf32, #tpu.memory_space<vmem>>, vector<1x1x512xf32>
    %5 = vector.shape_cast %4 : vector<1x1x512xf32> to vector<1x512xf32>
    %6 = vector.broadcast %5 : vector<1x512xf32> to vector<64x512xf32>
    %7 = arith.addf %3, %6 : vector<64x512xf32>
    %c0_7 = arith.constant 0 : index
    %c0_8 = arith.constant 0 : index
    %8 = vector.load %arg6[%c0_7, %c0_8] : memref<64x512xf32, #tpu.memory_space<vmem>>, vector<64x512xf32>
    tpu.vector_store %arg6[%c0_7, %c0_8], %7 {strides = array<i32>} : memref<64x512xf32, #tpu.memory_space<vmem>>, vector<64x512xf32>,
    %c0_9 = arith.constant 0 : index
    %c0_10 = arith.constant 0 : index
    %c0_11 = arith.constant 0 : index
    %9 = vector.load %arg3[%c0_9, %c0_10, %c0_11] : memref<1x128x512xbf16, #tpu.memory_space<vmem>>, vector<1x128x512xbf16>
    %10 = vector.shape_cast %9 : vector<1x128x512xbf16> to vector<128x512xbf16>
    %cst_12 = arith.constant 0.000000e+00 : f32
    %11 = vector.broadcast %cst_12 : f32 to vector<8x128xf32>
    %cst_13 = arith.constant 0.000000e+00 : f32
    %12 = vector.broadcast %cst_13 : f32 to vector<8x128xf32>
    %c0_i32 = arith.constant 0 : i32
    %c0_i32_14 = arith.constant 0 : i32
    %13 = arith.cmpi eq, %arg0, %c0_i32_14 : i32
    %c7_i32 = arith.constant 7 : i32
    %14 = arith.subi %c7_i32, %c0_i32 : i32
    %15 = arith.select %13, %c0_i32, %14 : i32
    %c8_i32 = arith.constant 8 : i32
    %16 = arith.muli %15, %c8_i32 : i32
    %17 = tpu.assume_multiple %16, 8 : i32
    %18 = arith.index_cast %17 : i32 to index
    %c0_15 = arith.constant 0 : index
    %19 = vector.load %arg6[%18, %c0_15] : memref<64x512xf32, #tpu.memory_space<vmem>>, vector<8x512xf32>
    %20 = arith.truncf %11 : vector<8x128xf32> to vector<8x128xbf16>
    %cst_16 = arith.constant dense<0.000000e+00> : vector<8x512xf32>
    %21 = tpu.matmul %20, %10, %cst_16 {dimension_numbers = #tpu.dot_dimension_numbers<[1], [0], [0], [1], [0, 0, 1, 1], [], []>} : vector<8x128xbf16>, vector<128x512xbf16>, vector<8x512xf32> -> vector<8x512xf32>
    %22 = arith.addf %19, %21 : vector<8x512xf32>
    %23 = vector.extract_strided_slice %22 {offsets = [0, 0], sizes = [8, 128], strides = [1, 1]} : vector<8x512xf32> to vector<8x128xf32>
    %24 = arith.negf %23 : vector<8x128xf32>
    %25 = math.exp %24 : vector<8x128xf32>
    %cst_17 = arith.constant 1.000000e+00 : f32
    %26 = vector.broadcast %cst_17 : f32 to vector<8x128xf32>
    %27 = arith.addf %26, %25 : vector<8x128xf32>
    %28 = arith.divf %26, %27 : vector<8x128xf32>
    %29 = vector.extract_strided_slice %22 {offsets = [0, 128], sizes = [8, 128], strides = [1, 1]} : vector<8x512xf32> to vector<8x128xf32>
    %30 = arith.negf %29 : vector<8x128xf32>
    %31 = math.exp %30 : vector<8x128xf32>
    %cst_18 = arith.constant 1.000000e+00 : f32
    %32 = vector.broadcast %cst_18 : f32 to vector<8x128xf32>
    %33 = arith.addf %32, %31 : vector<8x128xf32>
    %34 = arith.divf %32, %33 : vector<8x128xf32>
    %35 = vector.extract_strided_slice %22 {offsets = [0, 256], sizes = [8, 128], strides = [1, 1]} : vector<8x512xf32> to vector<8x128xf32>
    %36 = math.tanh %35 : vector<8x128xf32>
    %37 = vector.extract_strided_slice %22 {offsets = [0, 384], sizes = [8, 128], strides = [1, 1]} : vector<8x512xf32> to vector<8x128xf32>
    %38 = arith.negf %37 : vector<8x128xf32>
    %39 = math.exp %38 : vector<8x128xf32>
    %cst_19 = arith.constant 1.000000e+00 : f32
    %40 = vector.broadcast %cst_19 : f32 to vector<8x128xf32>
    %41 = arith.addf %40, %39 : vector<8x128xf32>
    %42 = arith.divf %40, %41 : vector<8x128xf32>
    %43 = arith.mulf %34, %12 : vector<8x128xf32>
    %44 = arith.mulf %28, %36 : vector<8x128xf32>
    %45 = arith.addf %43, %44 : vector<8x128xf32>
    %46 = math.tanh %45 : vector<8x128xf32>
    %47 = arith.mulf %42, %46 : vector<8x128xf32>
    %48 = arith.index_cast %17 : i32 to index
    %c0_20 = arith.constant 0 : index
    %49 = vector.load %arg7[%48, %c0_20] : memref<64x128xf32, #tpu.memory_space<vmem>>, vector<8x128xf32>
    tpu.vector_store %arg7[%48, %c0_20], %47 {strides = array<i32>} : memref<64x128xf32, #tpu.memory_space<vmem>>, vector<8x128xf32>,
    %c1_i32 = arith.constant 1 : i32
    %c0_i32_21 = arith.constant 0 : i32
    %50 = arith.cmpi eq, %arg0, %c0_i32_21 : i32
    %c7_i32_22 = arith.constant 7 : i32
    %51 = arith.subi %c7_i32_22, %c1_i32 : i32
    %52 = arith.select %50, %c1_i32, %51 : i32
    %c8_i32_23 = arith.constant 8 : i32
    %53 = arith.muli %52, %c8_i32_23 : i32
    %54 = tpu.assume_multiple %53, 8 : i32
    %55 = arith.index_cast %54 : i32 to index
    %c0_24 = arith.constant 0 : index
    %56 = vector.load %arg6[%55, %c0_24] : memref<64x512xf32, #tpu.memory_space<vmem>>, vector<8x512xf32>
    %57 = arith.truncf %47 : vector<8x128xf32> to vector<8x128xbf16>
    %cst_25 = arith.constant dense<0.000000e+00> : vector<8x512xf32>
    %58 = tpu.matmul %57, %10, %cst_25 {dimension_numbers = #tpu.dot_dimension_numbers<[1], [0], [0], [1], [0, 0, 1, 1], [], []>} : vector<8x128xbf16>, vector<128x512xbf16>, vector<8x512xf32> -> vector<8x512xf32>
    %59 = arith.addf %56, %58 : vector<8x512xf32>
    %60 = vector.extract_strided_slice %59 {offsets = [0, 0], sizes = [8, 128], strides = [1, 1]} : vector<8x512xf32> to vector<8x128xf32>
    %61 = arith.negf %60 : vector<8x128xf32>
    %62 = math.exp %61 : vector<8x128xf32>
    %cst_26 = arith.constant 1.000000e+00 : f32
    %63 = vector.broadcast %cst_26 : f32 to vector<8x128xf32>
    %64 = arith.addf %63, %62 : vector<8x128xf32>
    %65 = arith.divf %63, %64 : vector<8x128xf32>
    %66 = vector.extract_strided_slice %59 {offsets = [0, 128], sizes = [8, 128], strides = [1, 1]} : vector<8x512xf32> to vector<8x128xf32>
    %67 = arith.negf %66 : vector<8x128xf32>
    %68 = math.exp %67 : vector<8x128xf32>
    %cst_27 = arith.constant 1.000000e+00 : f32
    %69 = vector.broadcast %cst_27 : f32 to vector<8x128xf32>
    %70 = arith.addf %69, %68 : vector<8x128xf32>
    %71 = arith.divf %69, %70 : vector<8x128xf32>
    %72 = vector.extract_strided_slice %59 {offsets = [0, 256], sizes = [8, 128], strides = [1, 1]} : vector<8x512xf32> to vector<8x128xf32>
    %73 = math.tanh %72 : vector<8x128xf32>
    %74 = vector.extract_strided_slice %59 {offsets = [0, 384], sizes = [8, 128], strides = [1, 1]} : vector<8x512xf32> to vector<8x128xf32>
    %75 = arith.negf %74 : vector<8x128xf32>
    %76 = math.exp %75 : vector<8x128xf32>
    %cst_28 = arith.constant 1.000000e+00 : f32
    %77 = vector.broadcast %cst_28 : f32 to vector<8x128xf32>
    %78 = arith.addf %77, %76 : vector<8x128xf32>
    %79 = arith.divf %77, %78 : vector<8x128xf32>
    %80 = arith.mulf %71, %45 : vector<8x128xf32>
    %81 = arith.mulf %65, %73 : vector<8x128xf32>
    %82 = arith.addf %80, %81 : vector<8x128xf32>
    %83 = math.tanh %82 : vector<8x128xf32>
    %84 = arith.mulf %79, %83 : vector<8x128xf32>
    %85 = arith.index_cast %54 : i32 to index
    %c0_29 = arith.constant 0 : index
    %86 = vector.load %arg7[%85, %c0_29] : memref<64x128xf32, #tpu.memory_space<vmem>>, vector<8x128xf32>
    tpu.vector_store %arg7[%85, %c0_29], %84 {strides = array<i32>} : memref<64x128xf32, #tpu.memory_space<vmem>>, vector<8x128xf32>,
    %c2_i32 = arith.constant 2 : i32
    %c0_i32_30 = arith.constant 0 : i32
    %87 = arith.cmpi eq, %arg0, %c0_i32_30 : i32
    %c7_i32_31 = arith.constant 7 : i32
    %88 = arith.subi %c7_i32_31, %c2_i32 : i32
    %89 = arith.select %87, %c2_i32, %88 : i32
    %c8_i32_32 = arith.constant 8 : i32
    %90 = arith.muli %89, %c8_i32_32 : i32
    %91 = tpu.assume_multiple %90, 8 : i32
    %92 = arith.index_cast %91 : i32 to index
    %c0_33 = arith.constant 0 : index
    %93 = vector.load %arg6[%92, %c0_33] : memref<64x512xf32, #tpu.memory_space<vmem>>, vector<8x512xf32>
    %94 = arith.truncf %84 : vector<8x128xf32> to vector<8x128xbf16>
    %cst_34 = arith.constant dense<0.000000e+00> : vector<8x512xf32>
    %95 = tpu.matmul %94, %10, %cst_34 {dimension_numbers = #tpu.dot_dimension_numbers<[1], [0], [0], [1], [0, 0, 1, 1], [], []>} : vector<8x128xbf16>, vector<128x512xbf16>, vector<8x512xf32> -> vector<8x512xf32>
    %96 = arith.addf %93, %95 : vector<8x512xf32>
    %97 = vector.extract_strided_slice %96 {offsets = [0, 0], sizes = [8, 128], strides = [1, 1]} : vector<8x512xf32> to vector<8x128xf32>
    %98 = arith.negf %97 : vector<8x128xf32>
    %99 = math.exp %98 : vector<8x128xf32>
    %cst_35 = arith.constant 1.000000e+00 : f32
    %100 = vector.broadcast %cst_35 : f32 to vector<8x128xf32>
    %101 = arith.addf %100, %99 : vector<8x128xf32>
    %102 = arith.divf %100, %101 : vector<8x128xf32>
    %103 = vector.extract_strided_slice %96 {offsets = [0, 128], sizes = [8, 128], strides = [1, 1]} : vector<8x512xf32> to vector<8x128xf32>
    %104 = arith.negf %103 : vector<8x128xf32>
    %105 = math.exp %104 : vector<8x128xf32>
    %cst_36 = arith.constant 1.000000e+00 : f32
    %106 = vector.broadcast %cst_36 : f32 to vector<8x128xf32>
    %107 = arith.addf %106, %105 : vector<8x128xf32>
    %108 = arith.divf %106, %107 : vector<8x128xf32>
    %109 = vector.extract_strided_slice %96 {offsets = [0, 256], sizes = [8, 128], strides = [1, 1]} : vector<8x512xf32> to vector<8x128xf32>
    %110 = math.tanh %109 : vector<8x128xf32>
    %111 = vector.extract_strided_slice %96 {offsets = [0, 384], sizes = [8, 128], strides = [1, 1]} : vector<8x512xf32> to vector<8x128xf32>
    %112 = arith.negf %111 : vector<8x128xf32>
    %113 = math.exp %112 : vector<8x128xf32>
    %cst_37 = arith.constant 1.000000e+00 : f32
    %114 = vector.broadcast %cst_37 : f32 to vector<8x128xf32>
    %115 = arith.addf %114, %113 : vector<8x128xf32>
    %116 = arith.divf %114, %115 : vector<8x128xf32>
    %117 = arith.mulf %108, %82 : vector<8x128xf32>
    %118 = arith.mulf %102, %110 : vector<8x128xf32>
    %119 = arith.addf %117, %118 : vector<8x128xf32>
    %120 = math.tanh %119 : vector<8x128xf32>
    %121 = arith.mulf %116, %120 : vector<8x128xf32>
    %122 = arith.index_cast %91 : i32 to index
    %c0_38 = arith.constant 0 : index
    %123 = vector.load %arg7[%122, %c0_38] : memref<64x128xf32, #tpu.memory_space<vmem>>, vector<8x128xf32>
    tpu.vector_store %arg7[%122, %c0_38], %121 {strides = array<i32>} : memref<64x128xf32, #tpu.memory_space<vmem>>, vector<8x128xf32>,
    %c3_i32 = arith.constant 3 : i32
    %c0_i32_39 = arith.constant 0 : i32
    %124 = arith.cmpi eq, %arg0, %c0_i32_39 : i32
    %c7_i32_40 = arith.constant 7 : i32
    %125 = arith.subi %c7_i32_40, %c3_i32 : i32
    %126 = arith.select %124, %c3_i32, %125 : i32
    %c8_i32_41 = arith.constant 8 : i32
    %127 = arith.muli %126, %c8_i32_41 : i32
    %128 = tpu.assume_multiple %127, 8 : i32
    %129 = arith.index_cast %128 : i32 to index
    %c0_42 = arith.constant 0 : index
    %130 = vector.load %arg6[%129, %c0_42] : memref<64x512xf32, #tpu.memory_space<vmem>>, vector<8x512xf32>
    %131 = arith.truncf %121 : vector<8x128xf32> to vector<8x128xbf16>
    %cst_43 = arith.constant dense<0.000000e+00> : vector<8x512xf32>
    %132 = tpu.matmul %131, %10, %cst_43 {dimension_numbers = #tpu.dot_dimension_numbers<[1], [0], [0], [1], [0, 0, 1, 1], [], []>} : vector<8x128xbf16>, vector<128x512xbf16>, vector<8x512xf32> -> vector<8x512xf32>
    %133 = arith.addf %130, %132 : vector<8x512xf32>
    %134 = vector.extract_strided_slice %133 {offsets = [0, 0], sizes = [8, 128], strides = [1, 1]} : vector<8x512xf32> to vector<8x128xf32>
    %135 = arith.negf %134 : vector<8x128xf32>
    %136 = math.exp %135 : vector<8x128xf32>
    %cst_44 = arith.constant 1.000000e+00 : f32
    %137 = vector.broadcast %cst_44 : f32 to vector<8x128xf32>
    %138 = arith.addf %137, %136 : vector<8x128xf32>
    %139 = arith.divf %137, %138 : vector<8x128xf32>
    %140 = vector.extract_strided_slice %133 {offsets = [0, 128], sizes = [8, 128], strides = [1, 1]} : vector<8x512xf32> to vector<8x128xf32>
    %141 = arith.negf %140 : vector<8x128xf32>
    %142 = math.exp %141 : vector<8x128xf32>
    %cst_45 = arith.constant 1.000000e+00 : f32
    %143 = vector.broadcast %cst_45 : f32 to vector<8x128xf32>
    %144 = arith.addf %143, %142 : vector<8x128xf32>
    %145 = arith.divf %143, %144 : vector<8x128xf32>
    %146 = vector.extract_strided_slice %133 {offsets = [0, 256], sizes = [8, 128], strides = [1, 1]} : vector<8x512xf32> to vector<8x128xf32>
    %147 = math.tanh %146 : vector<8x128xf32>
    %148 = vector.extract_strided_slice %133 {offsets = [0, 384], sizes = [8, 128], strides = [1, 1]} : vector<8x512xf32> to vector<8x128xf32>
    %149 = arith.negf %148 : vector<8x128xf32>
    %150 = math.exp %149 : vector<8x128xf32>
    %cst_46 = arith.constant 1.000000e+00 : f32
    %151 = vector.broadcast %cst_46 : f32 to vector<8x128xf32>
    %152 = arith.addf %151, %150 : vector<8x128xf32>
    %153 = arith.divf %151, %152 : vector<8x128xf32>
    %154 = arith.mulf %145, %119 : vector<8x128xf32>
    %155 = arith.mulf %139, %147 : vector<8x128xf32>
    %156 = arith.addf %154, %155 : vector<8x128xf32>
    %157 = math.tanh %156 : vector<8x128xf32>
    %158 = arith.mulf %153, %157 : vector<8x128xf32>
    %159 = arith.index_cast %128 : i32 to index
    %c0_47 = arith.constant 0 : index
    %160 = vector.load %arg7[%159, %c0_47] : memref<64x128xf32, #tpu.memory_space<vmem>>, vector<8x128xf32>
    tpu.vector_store %arg7[%159, %c0_47], %158 {strides = array<i32>} : memref<64x128xf32, #tpu.memory_space<vmem>>, vector<8x128xf32>,
    %c4_i32 = arith.constant 4 : i32
    %c0_i32_48 = arith.constant 0 : i32
    %161 = arith.cmpi eq, %arg0, %c0_i32_48 : i32
    %c7_i32_49 = arith.constant 7 : i32
    %162 = arith.subi %c7_i32_49, %c4_i32 : i32
    %163 = arith.select %161, %c4_i32, %162 : i32
    %c8_i32_50 = arith.constant 8 : i32
    %164 = arith.muli %163, %c8_i32_50 : i32
    %165 = tpu.assume_multiple %164, 8 : i32
    %166 = arith.index_cast %165 : i32 to index
    %c0_51 = arith.constant 0 : index
    %167 = vector.load %arg6[%166, %c0_51] : memref<64x512xf32, #tpu.memory_space<vmem>>, vector<8x512xf32>
    %168 = arith.truncf %158 : vector<8x128xf32> to vector<8x128xbf16>
    %cst_52 = arith.constant dense<0.000000e+00> : vector<8x512xf32>
    %169 = tpu.matmul %168, %10, %cst_52 {dimension_numbers = #tpu.dot_dimension_numbers<[1], [0], [0], [1], [0, 0, 1, 1], [], []>} : vector<8x128xbf16>, vector<128x512xbf16>, vector<8x512xf32> -> vector<8x512xf32>
    %170 = arith.addf %167, %169 : vector<8x512xf32>
    %171 = vector.extract_strided_slice %170 {offsets = [0, 0], sizes = [8, 128], strides = [1, 1]} : vector<8x512xf32> to vector<8x128xf32>
    %172 = arith.negf %171 : vector<8x128xf32>
    %173 = math.exp %172 : vector<8x128xf32>
    %cst_53 = arith.constant 1.000000e+00 : f32
    %174 = vector.broadcast %cst_53 : f32 to vector<8x128xf32>
    %175 = arith.addf %174, %173 : vector<8x128xf32>
    %176 = arith.divf %174, %175 : vector<8x128xf32>
    %177 = vector.extract_strided_slice %170 {offsets = [0, 128], sizes = [8, 128], strides = [1, 1]} : vector<8x512xf32> to vector<8x128xf32>
    %178 = arith.negf %177 : vector<8x128xf32>
    %179 = math.exp %178 : vector<8x128xf32>
    %cst_54 = arith.constant 1.000000e+00 : f32
    %180 = vector.broadcast %cst_54 : f32 to vector<8x128xf32>
    %181 = arith.addf %180, %179 : vector<8x128xf32>
    %182 = arith.divf %180, %181 : vector<8x128xf32>
    %183 = vector.extract_strided_slice %170 {offsets = [0, 256], sizes = [8, 128], strides = [1, 1]} : vector<8x512xf32> to vector<8x128xf32>
    %184 = math.tanh %183 : vector<8x128xf32>
    %185 = vector.extract_strided_slice %170 {offsets = [0, 384], sizes = [8, 128], strides = [1, 1]} : vector<8x512xf32> to vector<8x128xf32>
    %186 = arith.negf %185 : vector<8x128xf32>
    %187 = math.exp %186 : vector<8x128xf32>
    %cst_55 = arith.constant 1.000000e+00 : f32
    %188 = vector.broadcast %cst_55 : f32 to vector<8x128xf32>
    %189 = arith.addf %188, %187 : vector<8x128xf32>
    %190 = arith.divf %188, %189 : vector<8x128xf32>
    %191 = arith.mulf %182, %156 : vector<8x128xf32>
    %192 = arith.mulf %176, %184 : vector<8x128xf32>
    %193 = arith.addf %191, %192 : vector<8x128xf32>
    %194 = math.tanh %193 : vector<8x128xf32>
    %195 = arith.mulf %190, %194 : vector<8x128xf32>
    %196 = arith.index_cast %165 : i32 to index
    %c0_56 = arith.constant 0 : index
    %197 = vector.load %arg7[%196, %c0_56] : memref<64x128xf32, #tpu.memory_space<vmem>>, vector<8x128xf32>
    tpu.vector_store %arg7[%196, %c0_56], %195 {strides = array<i32>} : memref<64x128xf32, #tpu.memory_space<vmem>>, vector<8x128xf32>,
    %c5_i32 = arith.constant 5 : i32
    %c0_i32_57 = arith.constant 0 : i32
    %198 = arith.cmpi eq, %arg0, %c0_i32_57 : i32
    %c7_i32_58 = arith.constant 7 : i32
    %199 = arith.subi %c7_i32_58, %c5_i32 : i32
    %200 = arith.select %198, %c5_i32, %199 : i32
    %c8_i32_59 = arith.constant 8 : i32
    %201 = arith.muli %200, %c8_i32_59 : i32
    %202 = tpu.assume_multiple %201, 8 : i32
    %203 = arith.index_cast %202 : i32 to index
    %c0_60 = arith.constant 0 : index
    %204 = vector.load %arg6[%203, %c0_60] : memref<64x512xf32, #tpu.memory_space<vmem>>, vector<8x512xf32>
    %205 = arith.truncf %195 : vector<8x128xf32> to vector<8x128xbf16>
    %cst_61 = arith.constant dense<0.000000e+00> : vector<8x512xf32>
    %206 = tpu.matmul %205, %10, %cst_61 {dimension_numbers = #tpu.dot_dimension_numbers<[1], [0], [0], [1], [0, 0, 1, 1], [], []>} : vector<8x128xbf16>, vector<128x512xbf16>, vector<8x512xf32> -> vector<8x512xf32>
    %207 = arith.addf %204, %206 : vector<8x512xf32>
    %208 = vector.extract_strided_slice %207 {offsets = [0, 0], sizes = [8, 128], strides = [1, 1]} : vector<8x512xf32> to vector<8x128xf32>
    %209 = arith.negf %208 : vector<8x128xf32>
    %210 = math.exp %209 : vector<8x128xf32>
    %cst_62 = arith.constant 1.000000e+00 : f32
    %211 = vector.broadcast %cst_62 : f32 to vector<8x128xf32>
    %212 = arith.addf %211, %210 : vector<8x128xf32>
    %213 = arith.divf %211, %212 : vector<8x128xf32>
    %214 = vector.extract_strided_slice %207 {offsets = [0, 128], sizes = [8, 128], strides = [1, 1]} : vector<8x512xf32> to vector<8x128xf32>
    %215 = arith.negf %214 : vector<8x128xf32>
    %216 = math.exp %215 : vector<8x128xf32>
    %cst_63 = arith.constant 1.000000e+00 : f32
    %217 = vector.broadcast %cst_63 : f32 to vector<8x128xf32>
    %218 = arith.addf %217, %216 : vector<8x128xf32>
    %219 = arith.divf %217, %218 : vector<8x128xf32>
    %220 = vector.extract_strided_slice %207 {offsets = [0, 256], sizes = [8, 128], strides = [1, 1]} : vector<8x512xf32> to vector<8x128xf32>
    %221 = math.tanh %220 : vector<8x128xf32>
    %222 = vector.extract_strided_slice %207 {offsets = [0, 384], sizes = [8, 128], strides = [1, 1]} : vector<8x512xf32> to vector<8x128xf32>
    %223 = arith.negf %222 : vector<8x128xf32>
    %224 = math.exp %223 : vector<8x128xf32>
    %cst_64 = arith.constant 1.000000e+00 : f32
    %225 = vector.broadcast %cst_64 : f32 to vector<8x128xf32>
    %226 = arith.addf %225, %224 : vector<8x128xf32>
    %227 = arith.divf %225, %226 : vector<8x128xf32>
    %228 = arith.mulf %219, %193 : vector<8x128xf32>
    %229 = arith.mulf %213, %221 : vector<8x128xf32>
    %230 = arith.addf %228, %229 : vector<8x128xf32>
    %231 = math.tanh %230 : vector<8x128xf32>
    %232 = arith.mulf %227, %231 : vector<8x128xf32>
    %233 = arith.index_cast %202 : i32 to index
    %c0_65 = arith.constant 0 : index
    %234 = vector.load %arg7[%233, %c0_65] : memref<64x128xf32, #tpu.memory_space<vmem>>, vector<8x128xf32>
    tpu.vector_store %arg7[%233, %c0_65], %232 {strides = array<i32>} : memref<64x128xf32, #tpu.memory_space<vmem>>, vector<8x128xf32>,
    %c6_i32 = arith.constant 6 : i32
    %c0_i32_66 = arith.constant 0 : i32
    %235 = arith.cmpi eq, %arg0, %c0_i32_66 : i32
    %c7_i32_67 = arith.constant 7 : i32
    %236 = arith.subi %c7_i32_67, %c6_i32 : i32
    %237 = arith.select %235, %c6_i32, %236 : i32
    %c8_i32_68 = arith.constant 8 : i32
    %238 = arith.muli %237, %c8_i32_68 : i32
    %239 = tpu.assume_multiple %238, 8 : i32
    %240 = arith.index_cast %239 : i32 to index
    %c0_69 = arith.constant 0 : index
    %241 = vector.load %arg6[%240, %c0_69] : memref<64x512xf32, #tpu.memory_space<vmem>>, vector<8x512xf32>
    %242 = arith.truncf %232 : vector<8x128xf32> to vector<8x128xbf16>
    %cst_70 = arith.constant dense<0.000000e+00> : vector<8x512xf32>
    %243 = tpu.matmul %242, %10, %cst_70 {dimension_numbers = #tpu.dot_dimension_numbers<[1], [0], [0], [1], [0, 0, 1, 1], [], []>} : vector<8x128xbf16>, vector<128x512xbf16>, vector<8x512xf32> -> vector<8x512xf32>
    %244 = arith.addf %241, %243 : vector<8x512xf32>
    %245 = vector.extract_strided_slice %244 {offsets = [0, 0], sizes = [8, 128], strides = [1, 1]} : vector<8x512xf32> to vector<8x128xf32>
    %246 = arith.negf %245 : vector<8x128xf32>
    %247 = math.exp %246 : vector<8x128xf32>
    %cst_71 = arith.constant 1.000000e+00 : f32
    %248 = vector.broadcast %cst_71 : f32 to vector<8x128xf32>
    %249 = arith.addf %248, %247 : vector<8x128xf32>
    %250 = arith.divf %248, %249 : vector<8x128xf32>
    %251 = vector.extract_strided_slice %244 {offsets = [0, 128], sizes = [8, 128], strides = [1, 1]} : vector<8x512xf32> to vector<8x128xf32>
    %252 = arith.negf %251 : vector<8x128xf32>
    %253 = math.exp %252 : vector<8x128xf32>
    %cst_72 = arith.constant 1.000000e+00 : f32
    %254 = vector.broadcast %cst_72 : f32 to vector<8x128xf32>
    %255 = arith.addf %254, %253 : vector<8x128xf32>
    %256 = arith.divf %254, %255 : vector<8x128xf32>
    %257 = vector.extract_strided_slice %244 {offsets = [0, 256], sizes = [8, 128], strides = [1, 1]} : vector<8x512xf32> to vector<8x128xf32>
    %258 = math.tanh %257 : vector<8x128xf32>
    %259 = vector.extract_strided_slice %244 {offsets = [0, 384], sizes = [8, 128], strides = [1, 1]} : vector<8x512xf32> to vector<8x128xf32>
    %260 = arith.negf %259 : vector<8x128xf32>
    %261 = math.exp %260 : vector<8x128xf32>
    %cst_73 = arith.constant 1.000000e+00 : f32
    %262 = vector.broadcast %cst_73 : f32 to vector<8x128xf32>
    %263 = arith.addf %262, %261 : vector<8x128xf32>
    %264 = arith.divf %262, %263 : vector<8x128xf32>
    %265 = arith.mulf %256, %230 : vector<8x128xf32>
    %266 = arith.mulf %250, %258 : vector<8x128xf32>
    %267 = arith.addf %265, %266 : vector<8x128xf32>
    %268 = math.tanh %267 : vector<8x128xf32>
    %269 = arith.mulf %264, %268 : vector<8x128xf32>
    %270 = arith.index_cast %239 : i32 to index
    %c0_74 = arith.constant 0 : index
    %271 = vector.load %arg7[%270, %c0_74] : memref<64x128xf32, #tpu.memory_space<vmem>>, vector<8x128xf32>
    tpu.vector_store %arg7[%270, %c0_74], %269 {strides = array<i32>} : memref<64x128xf32, #tpu.memory_space<vmem>>, vector<8x128xf32>,
    %c7_i32_75 = arith.constant 7 : i32
    %c0_i32_76 = arith.constant 0 : i32
    %272 = arith.cmpi eq, %arg0, %c0_i32_76 : i32
    %c7_i32_77 = arith.constant 7 : i32
    %273 = arith.subi %c7_i32_77, %c7_i32_75 : i32
    %274 = arith.select %272, %c7_i32_75, %273 : i32
    %c8_i32_78 = arith.constant 8 : i32
    %275 = arith.muli %274, %c8_i32_78 : i32
    %276 = tpu.assume_multiple %275, 8 : i32
    %277 = arith.index_cast %276 : i32 to index
    %c0_79 = arith.constant 0 : index
    %278 = vector.load %arg6[%277, %c0_79] : memref<64x512xf32, #tpu.memory_space<vmem>>, vector<8x512xf32>
    %279 = arith.truncf %269 : vector<8x128xf32> to vector<8x128xbf16>
    %cst_80 = arith.constant dense<0.000000e+00> : vector<8x512xf32>
    %280 = tpu.matmul %279, %10, %cst_80 {dimension_numbers = #tpu.dot_dimension_numbers<[1], [0], [0], [1], [0, 0, 1, 1], [], []>} : vector<8x128xbf16>, vector<128x512xbf16>, vector<8x512xf32> -> vector<8x512xf32>
    %281 = arith.addf %278, %280 : vector<8x512xf32>
    %282 = vector.extract_strided_slice %281 {offsets = [0, 0], sizes = [8, 128], strides = [1, 1]} : vector<8x512xf32> to vector<8x128xf32>
    %283 = arith.negf %282 : vector<8x128xf32>
    %284 = math.exp %283 : vector<8x128xf32>
    %cst_81 = arith.constant 1.000000e+00 : f32
    %285 = vector.broadcast %cst_81 : f32 to vector<8x128xf32>
    %286 = arith.addf %285, %284 : vector<8x128xf32>
    %287 = arith.divf %285, %286 : vector<8x128xf32>
    %288 = vector.extract_strided_slice %281 {offsets = [0, 128], sizes = [8, 128], strides = [1, 1]} : vector<8x512xf32> to vector<8x128xf32>
    %289 = arith.negf %288 : vector<8x128xf32>
    %290 = math.exp %289 : vector<8x128xf32>
    %cst_82 = arith.constant 1.000000e+00 : f32
    %291 = vector.broadcast %cst_82 : f32 to vector<8x128xf32>
    %292 = arith.addf %291, %290 : vector<8x128xf32>
    %293 = arith.divf %291, %292 : vector<8x128xf32>
    %294 = vector.extract_strided_slice %281 {offsets = [0, 256], sizes = [8, 128], strides = [1, 1]} : vector<8x512xf32> to vector<8x128xf32>
    %295 = math.tanh %294 : vector<8x128xf32>
    %296 = vector.extract_strided_slice %281 {offsets = [0, 384], sizes = [8, 128], strides = [1, 1]} : vector<8x512xf32> to vector<8x128xf32>
    %297 = arith.negf %296 : vector<8x128xf32>
    %298 = math.exp %297 : vector<8x128xf32>
    %cst_83 = arith.constant 1.000000e+00 : f32
    %299 = vector.broadcast %cst_83 : f32 to vector<8x128xf32>
    %300 = arith.addf %299, %298 : vector<8x128xf32>
    %301 = arith.divf %299, %300 : vector<8x128xf32>
    %302 = arith.mulf %293, %267 : vector<8x128xf32>
    %303 = arith.mulf %287, %295 : vector<8x128xf32>
    %304 = arith.addf %302, %303 : vector<8x128xf32>
    %305 = math.tanh %304 : vector<8x128xf32>
    %306 = arith.mulf %301, %305 : vector<8x128xf32>
    %307 = arith.index_cast %276 : i32 to index
    %c0_84 = arith.constant 0 : index
    %308 = vector.load %arg7[%307, %c0_84] : memref<64x128xf32, #tpu.memory_space<vmem>>, vector<8x128xf32>
    tpu.vector_store %arg7[%307, %c0_84], %306 {strides = array<i32>} : memref<64x128xf32, #tpu.memory_space<vmem>>, vector<8x128xf32>,
    %c8_i32_85 = arith.constant 8 : i32
    %c0_86 = arith.constant 0 : index
    %c0_87 = arith.constant 0 : index
    %309 = vector.load %arg7[%c0_86, %c0_87] : memref<64x128xf32, #tpu.memory_space<vmem>>, vector<64x128xf32>
    %310 = arith.truncf %309 : vector<64x128xf32> to vector<64x128xbf16>
    %c0_88 = arith.constant 0 : index
    %c0_89 = arith.constant 0 : index
    %311 = vector.load %arg5[%c0_88, %c0_89] : memref<64x128xbf16, #tpu.memory_space<vmem>>, vector<64x128xbf16>
    tpu.vector_store %arg5[%c0_88, %c0_89], %310 {strides = array<i32>} : memref<64x128xbf16, #tpu.memory_space<vmem>>, vector<64x128xbf16>,
    return
  }
  func.func @transform_0(%arg0: i32) -> (i32, i32) {
    %c0_i32 = arith.constant 0 : i32
    %c0_i32_0 = arith.constant 0 : i32
    %c0_i32_1 = arith.constant 0 : i32
    return %c0_i32, %c0_i32_0 : i32, i32
  }
  func.func @transform_1(%arg0: i32) -> (i32, i32, i32) {
    %c0_i32 = arith.constant 0 : i32
    %c0_i32_0 = arith.constant 0 : i32
    %c0_i32_1 = arith.constant 0 : i32
    return %arg0, %c0_i32, %c0_i32_0 : i32, i32, i32
  }
  func.func @transform_2(%arg0: i32) -> (i32, i32, i32) {
    %c0_i32 = arith.constant 0 : i32
    %c0_i32_0 = arith.constant 0 : i32
    %c0_i32_1 = arith.constant 0 : i32
    return %arg0, %c0_i32, %c0_i32_0 : i32, i32, i32
  }
  func.func @transform_3(%arg0: i32) -> (i32, i32, i32) {
    %c0_i32 = arith.constant 0 : i32
    %c0_i32_0 = arith.constant 0 : i32
    %c0_i32_1 = arith.constant 0 : i32
    return %arg0, %c0_i32, %c0_i32_0 : i32, i32, i32
  }
  func.func @transform_4(%arg0: i32) -> (i32, i32) {
    %c0_i32 = arith.constant 0 : i32
    %c0_i32_0 = arith.constant 0 : i32
    return %c0_i32, %arg0 : i32, i32
  }
}

</mosaic_0001>

<llo_original>
// kernel: tpu_custom_call.1
$region0: #{tpu_custom_call.1}
  #allocation0 [shape = 'u32[]', space=smem, size = 0x4, offset = 0x4, fixed_abs, tag = 'smem constant byte address 0x4 - core index']
  #allocation1 [shape = 'u32[144,128]{1,0:T(1,128)}', space=vmem, size = 0x12000, scoped, tag = 'internal scratch']
  #allocation2 [shape = 'f32[64,512]{1,0:T(8,128)}', space=vmem, size = 0x20000, scoped, tag = 'scratch operand']
  #allocation3 [shape = 'f32[64,128]{1,0:T(8,128)}', space=vmem, size = 0x8000, scoped, tag = 'scratch operand']
  %s0 = inlined_call_operand.vmem [shape: bf16[64,16], index: 0, kind: input, shape index: {}]
  %s1 = inlined_call_operand.hbm [shape: bf16[2,16,512], index: 1, kind: input, shape index: {}]
  %s2 = inlined_call_operand.hbm [shape: bf16[2,128,512], index: 2, kind: input, shape index: {}]
  %s3 = inlined_call_operand.vmem [shape: f32[2,1,512], index: 3, kind: input, shape index: {}]
  %s4 = inlined_call_operand.hbm [shape: bf16[64,256], index: 4, kind: output, shape index: {}]
  %s5 = sld [smem:[#allocation0]]
  $region57: #{tpu_custom_call.1} parent=0
    _
  %s7 = ssub.s32 1, %s5
  %s8 = scalar_select 0, %s7, %s5
  $region1: #{tpu_custom_call.1} parent=0
    #allocation4 [shape = 'u8[32768]{0}', space=vmem, size = 0x8000, scoped, tag = 'input window, operand 1']
    #allocation5 [shape = 's32[2]{0}', space=sflag, size = 0x8, scoped, tag = 'scoped memory for tpu_custom_call.1']
    #allocation6 [shape = 's32[2]{0}', space=sflag, size = 0x8, scoped, tag = 'scoped memory for tpu_custom_call.1']
    #allocation7 [shape = 'u8[262144]{0}', space=vmem, size = 0x40000, scoped, tag = 'input window, operand 2']
    #allocation8 [shape = 's32[2]{0}', space=sflag, size = 0x8, scoped, tag = 'scoped memory for tpu_custom_call.1']
    #allocation9 [shape = 'u8[32768]{0}', space=vmem, size = 0x8000, scoped, tag = 'output window, operand 0']
    %9 = vsyncpa [#allocation5], 0
    %s10 = scalar_lea.sflag [#allocation5], 1
    %11 = vsyncpa %s10, 0
    %12 = vsyncpa [#allocation8], 0
    %s13 = scalar_lea.sflag [#allocation8], 1
    %14 = vsyncpa %s13, 0
    %15 = vsyncpa [#allocation6], 0
    %s16 = scalar_lea.sflag [#allocation6], 1
    %17 = vsyncpa %s16, 0
    loop: start=0, step=1, limit=4
    $region2: #{tpu_custom_call.1} parent=1 // loop_pre_header
      _
    $region3: #{tpu_custom_call.1} parent=1 // loop_header
      %s19 = sphi 0, %s23
      %p20 = scmp.ge.s32.totalorder %s19, 4
      %s27 = sphi 0, %s27
      %s29 = sphi 0, %s27
      %s30 = sphi 0, %s29
      %s44 = sphi 0, %s30
      %s50 = sphi 0, %s52
      %s53 = sphi 0, %s50
      %s54 = sphi 0, %s53
      %s70 = sphi 0, %s54
      %s76 = sphi 0, %s78
      %s79 = sphi 0, %s76
      %s80 = sphi 0, %s79
      %s96 = sphi 0, %s80
      %s102 = sphi 0, %s104
      %s105 = sphi 0, %s102
      %s106 = sphi 0, %s105
      %s122 = sphi 0, %s106
      %s128 = sphi 0, %s130
      %s131 = sphi 0, %s128
      %s132 = sphi 0, %s131
      %s148 = sphi 0, %s132
    $region4: #{tpu_custom_call.1} parent=1 // loop_header_branch
      %22 = sbr.rel (%p20) target = $region8
    $region5: #{tpu_custom_call.1} parent=1 // loop_body
      %s24 = ssub.s32 %s19, 1
      %s25 = ssub.s32 %s19, 2
      %s26 = sadd.s32 %s19, 1
      %s28 = sadd.s32 %s27, 1
      %p31 = scmp.eq.s32.totalorder %s19, 1
      %p32 = scmp.ne.s32.totalorder %s27, %s29
      %p33 = scmp.eq.s32.totalorder %s19, 0
      %p34 = por %p32, %p33
      %p35 = scmp.ne.s32.totalorder %s27, %s29
      %p36 = scmp.eq.s32.totalorder %s24, 1
      %p37 = por %p35, %p36
      %p38 = scmp.ne.s32.totalorder %s29, %s30
      %p39 = scmp.eq.s32.totalorder %s24, 0
      %p40 = por %p38, %p39
      %p41 = scmp.ne.s32.totalorder %s29, %s30
      %p42 = scmp.eq.s32.totalorder %s25, 1
      %p43 = por %p41, %p42
      %p45 = scmp.ne.s32.totalorder %s30, %s44
      %p46 = scmp.eq.s32.totalorder %s25, 0
      %p47 = por %p45, %p46
      %s48 = ssub.s32 %s19, %s26
      %p49 = scmp.eq.s32.totalorder %s48, 0
      %s51 = sadd.s32 %s50, 1
      %s52 = scalar_select %p49, %s50, %s51
      %p55 = pneg %p49
      %p56 = scmp.eq.s32.totalorder %s19, 1
      %p57 = por %p55, %p56
      %p58 = scmp.ne.s32.totalorder %s50, %s53
      %p59 = scmp.eq.s32.totalorder %s19, 0
      %p60 = por %p58, %p59
      %p61 = scmp.ne.s32.totalorder %s50, %s53
      %p62 = scmp.eq.s32.totalorder %s24, 1
      %p63 = por %p61, %p62
      %p64 = scmp.ne.s32.totalorder %s53, %s54
      %p65 = scmp.eq.s32.totalorder %s24, 0
      %p66 = por %p64, %p65
      %p67 = scmp.ne.s32.totalorder %s53, %s54
      %p68 = scmp.eq.s32.totalorder %s25, 1
      %p69 = por %p67, %p68
      %p71 = scmp.ne.s32.totalorder %s54, %s70
      %p72 = scmp.eq.s32.totalorder %s25, 0
      %p73 = por %p71, %p72
      %s74 = ssub.s32 %s19, %s26
      %p75 = scmp.eq.s32.totalorder %s74, 0
      %s77 = sadd.s32 %s76, 1
      %s78 = scalar_select %p75, %s76, %s77
      %p81 = pneg %p75
      %p82 = scmp.eq.s32.totalorder %s19, 1
      %p83 = por %p81, %p82
      %p84 = scmp.ne.s32.totalorder %s76, %s79
      %p85 = scmp.eq.s32.totalorder %s19, 0
      %p86 = por %p84, %p85
      %p87 = scmp.ne.s32.totalorder %s76, %s79
      %p88 = scmp.eq.s32.totalorder %s24, 1
      %p89 = por %p87, %p88
      %p90 = scmp.ne.s32.totalorder %s79, %s80
      %p91 = scmp.eq.s32.totalorder %s24, 0
      %p92 = por %p90, %p91
      %p93 = scmp.ne.s32.totalorder %s79, %s80
      %p94 = scmp.eq.s32.totalorder %s25, 1
      %p95 = por %p93, %p94
      %p97 = scmp.ne.s32.totalorder %s80, %s96
      %p98 = scmp.eq.s32.totalorder %s25, 0
      %p99 = por %p97, %p98
      %s100 = ssub.s32 %s19, %s26
      %p101 = scmp.eq.s32.totalorder %s100, 0
      %s103 = sadd.s32 %s102, 1
      %s104 = scalar_select %p101, %s102, %s103
      %p107 = pneg %p101
      %p108 = scmp.eq.s32.totalorder %s19, 1
      %p109 = por %p107, %p108
      %p110 = scmp.ne.s32.totalorder %s102, %s105
      %p111 = scmp.eq.s32.totalorder %s19, 0
      %p112 = por %p110, %p111
      %p113 = scmp.ne.s32.totalorder %s102, %s105
      %p114 = scmp.eq.s32.totalorder %s24, 1
      %p115 = por %p113, %p114
      %p116 = scmp.ne.s32.totalorder %s105, %s106
      %p117 = scmp.eq.s32.totalorder %s24, 0
      %p118 = por %p116, %p117
      %p119 = scmp.ne.s32.totalorder %s105, %s106
      %p120 = scmp.eq.s32.totalorder %s25, 1
      %p121 = por %p119, %p120
      %p123 = scmp.ne.s32.totalorder %s106, %s122
      %p124 = scmp.eq.s32.totalorder %s25, 0
      %p125 = por %p123, %p124
      %s126 = ssub.s32 %s19, %s26
      %p127 = scmp.eq.s32.totalorder %s126, 0
      %s129 = sadd.s32 %s128, 1
      %s130 = scalar_select %p127, %s128, %s129
      %p133 = pneg %p127
      %p134 = scmp.eq.s32.totalorder %s19, 1
      %p135 = por %p133, %p134
      %p136 = scmp.ne.s32.totalorder %s128, %s131
      %p137 = scmp.eq.s32.totalorder %s19, 0
      %p138 = por %p136, %p137
      %p139 = scmp.ne.s32.totalorder %s128, %s131
      %p140 = scmp.eq.s32.totalorder %s24, 1
      %p141 = por %p139, %p140
      %p142 = scmp.ne.s32.totalorder %s131, %s132
      %p143 = scmp.eq.s32.totalorder %s24, 0
      %p144 = por %p142, %p143
      %p145 = scmp.ne.s32.totalorder %s131, %s132
      %p146 = scmp.eq.s32.totalorder %s25, 1
      %p147 = por %p145, %p146
      %p149 = scmp.ne.s32.totalorder %s132, %s148
      %p150 = scmp.eq.s32.totalorder %s25, 0
      %p151 = por %p149, %p150
      %p152 = scmp.le.s32.totalorder 1, %s19
      %p153 = scmp.lt.s32.totalorder %s19, 3
      %p154 = pnand %p152, %p153
      %p155 = pneg %p154
      // Predicated region
      $region9: #{tpu_custom_call.1} parent=5 // pred_check
        _
      $region10: #{tpu_custom_call.1} parent=5 // pred_check_branch
        %157 = sbr.rel (%p154) target = $region12
      $region11: #{tpu_custom_call.1} parent=5 // pred_region
        %s158 = ssub.s32 %s19, 1
        // Predicated region
        $region13: #{tpu_custom_call.1} parent=11 // pred_check
          %p159 = pneg %p40
        $region14: #{tpu_custom_call.1} parent=11 // pred_check_branch
          %161 = sbr.rel (%p159) target = $region16
        $region15: #{tpu_custom_call.1} parent=11 // pred_region
          _
        $region16: #{tpu_custom_call.1} parent=11 // pred_fallthru
          _
      $region12: #{tpu_custom_call.1} parent=5 // pred_fallthru
        _
      %p162 = scmp.lt.s32.totalorder %s19, 2
      // Predicated region
      $region17: #{tpu_custom_call.1} parent=5 // pred_check
        %p163 = pneg %p162
      $region18: #{tpu_custom_call.1} parent=5 // pred_check_branch
        %165 = sbr.rel (%p163) target = $region20
      $region19: #{tpu_custom_call.1} parent=5 // pred_region
        // Predicated region
        $region21: #{tpu_custom_call.1} parent=19 // pred_check
          %p166 = pneg %p60
        $region22: #{tpu_custom_call.1} parent=19 // pred_check_branch
          %168 = sbr.rel (%p166) target = $region24
        $region23: #{tpu_custom_call.1} parent=19 // pred_region
          %s169 = sand.u32 %s50, 1
          %s170 = scalar_lea.sflag [#allocation5], %s169
          %s171 = sand.u32 %s50, 1
          %s172 = smul.addr %s171, 32
          %s173 = scalar_lea.vmem [#allocation4], %s172
          %s175 = ssub.s32 512, 512
          %176 = vsyncadd %s170, %s175
          %s177 = smul.addr %s19, 8
          %s178 = smul.addr %s177, 64
          %s179 = scalar_lea.hbm %s1, %s178
          %s180 = sshll.u32 %s173, 4
          %s181 = int_to_ptr.vmem [resolvable:$true] %s180
          %186 = dma.hbm_to_vmem [thread:$0]  %s179, 512, %s181, %s170, 256, 256, 16
        $region24: #{tpu_custom_call.1} parent=19 // pred_fallthru
          _
        // Predicated region
        $region25: #{tpu_custom_call.1} parent=19 // pred_check
          %p187 = pneg %p86
        $region26: #{tpu_custom_call.1} parent=19 // pred_check_branch
          %189 = sbr.rel (%p187) target = $region28
        $region27: #{tpu_custom_call.1} parent=19 // pred_region
          %s190 = sand.u32 %s76, 1
          %s191 = scalar_lea.sflag [#allocation8], %s190
          %s192 = sand.u32 %s76, 1
          %s193 = smul.addr %s192, 256
          %s194 = scalar_lea.vmem [#allocation7], %s193
          %s196 = ssub.s32 4096, 4096
          %197 = vsyncadd %s191, %s196
          %s198 = smul.addr %s19, 64
          %s199 = smul.addr %s198, 64
          %s200 = scalar_lea.hbm %s2, %s199
          %s201 = sshll.u32 %s194, 4
          %s202 = int_to_ptr.vmem [resolvable:$true] %s201
          %207 = dma.hbm_to_vmem [thread:$0]  %s200, 4096, %s202, %s191, 256, 256, 16
        $region28: #{tpu_custom_call.1} parent=19 // pred_fallthru
          _
        // Predicated region
        $region29: #{tpu_custom_call.1} parent=19 // pred_check
          %p208 = pneg %p112
        $region30: #{tpu_custom_call.1} parent=19 // pred_check_branch
          %210 = sbr.rel (%p208) target = $region32
        $region31: #{tpu_custom_call.1} parent=19 // pred_region
          %p211 = scmp.lt.s32.totalorder %s19, 1
          %s212 = scalar_select %p211, %s19, 1
          %s213 = smul.addr %s212, 4
          %s214 = scalar_lea.vmem %s3, %s213
        $region32: #{tpu_custom_call.1} parent=19 // pred_fallthru
          _
      $region20: #{tpu_custom_call.1} parent=5 // pred_fallthru
        _
      %p215 = scmp.le.s32.totalorder 1, %s19
      %p216 = scmp.lt.s32.totalorder %s19, 3
      %p217 = pnand %p215, %p216
      %p218 = pneg %p217
      // Predicated region
      $region33: #{tpu_custom_call.1} parent=5 // pred_check
        _
      $region34: #{tpu_custom_call.1} parent=5 // pred_check_branch
        %220 = sbr.rel (%p217) target = $region36
      $region35: #{tpu_custom_call.1} parent=5 // pred_region
        %s221 = ssub.s32 %s19, 1
        %s222 = sand.u32 %s53, 1
        %s223 = scalar_lea.sflag [#allocation5], %s222
        %s224 = sand.u32 %s53, 1
        %s225 = smul.addr %s224, 32
        %s226 = scalar_lea.vmem [#allocation4], %s225
        // Predicated region
        $region37: #{tpu_custom_call.1} parent=35 // pred_check
          %p227 = pneg %p66
        $region38: #{tpu_custom_call.1} parent=35 // pred_check_branch
          %229 = sbr.rel (%p227) target = $region40
        $region39: #{tpu_custom_call.1} parent=35 // pred_region
          %230 = dma.done %s223, 512
        $region40: #{tpu_custom_call.1} parent=35 // pred_fallthru
          _
        %s231 = sand.u32 %s79, 1
        %s232 = scalar_lea.sflag [#allocation8], %s231
        %s233 = sand.u32 %s79, 1
        %s234 = smul.addr %s233, 256
        %s235 = scalar_lea.vmem [#allocation7], %s234
        // Predicated region
        $region41: #{tpu_custom_call.1} parent=35 // pred_check
          %p236 = pneg %p92
        $region42: #{tpu_custom_call.1} parent=35 // pred_check_branch
          %238 = sbr.rel (%p236) target = $region44
        $region43: #{tpu_custom_call.1} parent=35 // pred_region
          %239 = dma.done %s232, 4096
        $region44: #{tpu_custom_call.1} parent=35 // pred_fallthru
          _
        %p240 = pneg %p40
        %p241 = pneg %p37
        %s242 = sand.u32 %s53, 1
        %s243 = scalar_lea.sflag [#allocation5], %s242
        %s244 = sand.u32 %s53, 1
        %s245 = smul.addr %s244, 32
        %s246 = scalar_lea.vmem [#allocation4], %s245
        %p247 = pneg %p66
        %p248 = pneg %p63
        %s249 = sand.u32 %s79, 1
        %s250 = scalar_lea.sflag [#allocation8], %s249
        %s251 = sand.u32 %s79, 1
        %s252 = smul.addr %s251, 256
        %s253 = scalar_lea.vmem [#allocation7], %s252
        %p254 = pneg %p92
        %p255 = pneg %p89
        %p256 = scmp.lt.s32.totalorder %s24, 1
        %s257 = scalar_select %p256, %s24, 1
        %s258 = smul.addr %s257, 4
        %s259 = scalar_lea.vmem %s3, %s258
        %p260 = pneg %p118
        %p261 = pneg %p115
        %p262 = pneg %p144
        %p263 = pneg %p141
        %s264 = sand.u32 %s131, 1
        %s265 = scalar_lea.sflag [#allocation6], %s264
        %s266 = sand.u32 %s131, 1
        %s267 = smul.addr %s266, 32
        %s268 = scalar_lea.vmem [#allocation9], %s267
        %p269 = scmp.lt.s32.totalorder %s24, 1
        %s270 = scalar_select %p269, %s24, 1
        %s271 = smul.addr %s270, 4
        %s272 = scalar_lea.vmem %s3, %s271
        %v274 = vld [vmem:[%s0] sm:$0xf]
        %v275 = vld [vmem:[%s0 + $0x4] sm:$0xf]
        %v276 = vld [vmem:[%s0 + $0x8] sm:$0xf]
        %v277 = vld [vmem:[%s0 + $0xc] sm:$0xf]
        %v278 = vld [vmem:[%s0 + $0x10] sm:$0xf]
        %v279 = vld [vmem:[%s0 + $0x14] sm:$0xf]
        %v280 = vld [vmem:[%s0 + $0x18] sm:$0xf]
        %v281 = vld [vmem:[%s0 + $0x1c] sm:$0xf]
        %v282 = vld [vmem:[%s226] sm:$0xff]
        %v283 = vld [vmem:[%s226 + $0x8] sm:$0xff]
        %v284 = vld [vmem:[%s226 + $0x10] sm:$0xff]
        %v285 = vld [vmem:[%s226 + $0x18] sm:$0xff]
        %v286 = vld [vmem:[%s272] sm:$0xf]
        %v288 = vlaneseq
        %v289 = vshrl.u32 %v288, 7
        %v290 = vsub.s32 0, %v289
        %v291 = vrot.slane %v286, %v290
        %v292 = vlaneseq
        %v293 = vshrl.u32 %v292, 7
        %v294 = vsub.s32 1, %v293
        %v295 = vrot.slane %v286, %v294
        %v296 = vlaneseq
        %v297 = vshrl.u32 %v296, 7
        %v298 = vsub.s32 2, %v297
        %v299 = vrot.slane %v286, %v298
        %v300 = vlaneseq
        %v301 = vshrl.u32 %v300, 7
        %v302 = vsub.s32 3, %v301
        %v303 = vrot.slane %v286, %v302
        %v316 = vunpack.c.l.b16 %v274
        %v317 = vunpack.c.l.b16 %v275
        %v318 = vunpack.c.l.b16 %v276
        %v319 = vunpack.c.l.b16 %v277
        %v320 = vunpack.c.l.b16 %v278
        %v321 = vunpack.c.l.b16 %v279
        %v322 = vunpack.c.l.b16 %v280
        %v323 = vunpack.c.l.b16 %v281
        %v324 = vpack.c.b16 %v317, %v316
        %v325 = vpack.c.b16 %v319, %v318
        %v326 = vpack.c.b16 %v321, %v320
        %v327 = vpack.c.b16 %v323, %v322
        %v332 = vunpack.c.l.b16 %v282
        %v333 = vunpack.c.h.b16 %v282
        %v334 = vunpack.c.l.b16 %v283
        %v335 = vunpack.c.h.b16 %v283
        %v336 = vunpack.c.l.b16 %v284
        %v337 = vunpack.c.h.b16 %v284
        %v338 = vunpack.c.l.b16 %v285
        %v339 = vunpack.c.h.b16 %v285
        %v340 = vpack.c.b16 %v336, %v332
        %v341 = vpack.c.b16 %v337, %v333
        %v342 = vpack.c.b16 %v338, %v334
        %v343 = vpack.c.b16 %v339, %v335
        %vm348 = vcmask 130048
        %v350 = vsel %vm348, %v324, 0
        %v353 = vsel %vm348, %v325, 0
        %v356 = vsel %vm348, %v326, 0
        %v359 = vsel %vm348, %v327, 0
        %361 = vmatprep.subr.bf16.mxu0 %v341
        %362 = vmatpush1.bf16.msra.mxu0 %v340
        %363 = vmatprep.subr.bf16.mxu0 0
        %364 = vmatpush1.bf16.msra.mxu0 0
        %365 = vmatprep.subr.bf16.mxu0 0
        %366 = vmatpush1.bf16.msra.mxu0 0
        %367 = vmatprep.subr.bf16.mxu0 0
        %368 = vmatpush1.bf16.msra.mxu0 0
        %369 = vmatprep.subr.bf16.mxu0 0
        %370 = vmatpush1.bf16.msra.mxu0 0
        %371 = vmatprep.subr.bf16.mxu0 0
        %372 = vmatpush1.bf16.msra.mxu0 0
        %373 = vmatprep.subr.bf16.mxu0 0
        %374 = vmatpush1.bf16.msra.mxu0 0
        %375 = vmatprep.subr.bf16.mxu0 0
        %376 = vmatpush1.bf16.msra.mxu0 0
        %377 = vmatprep.subr.bf16.mxu0 0
        %378 = vmatpush1.bf16.msra.mxu0 0
        %379 = vmatprep.subr.bf16.mxu0 0
        %380 = vmatpush1.bf16.msra.mxu0 0
        %381 = vmatprep.subr.bf16.mxu0 0
        %382 = vmatpush1.bf16.msra.mxu0 0
        %383 = vmatprep.subr.bf16.mxu0 0
        %384 = vmatpush1.bf16.msra.mxu0 0
        %385 = vmatprep.subr.bf16.mxu0 0
        %386 = vmatpush1.bf16.msra.mxu0 0
        %387 = vmatprep.subr.bf16.mxu0 0
        %388 = vmatpush1.bf16.msra.mxu0 0
        %389 = vmatprep.subr.bf16.mxu0 0
        %390 = vmatpush1.bf16.msra.mxu0 0
        %391 = vmatprep.subr.bf16.mxu0 0
        %392 = vmatpush1.bf16.msra.mxu0 0
        %393 = vmatprep.mubr.bf16.mxu0 0
        %394 = vmatmul.mubr.bf16.gmra.mrb[0].mxu0 %v350
        %v395 = vpop.f32.mrb[0].mxu0
        %v396 = vadd.f32 %v291, %v395
        %v397 = vpop.f32.mrb[0].mxu0
        %v398 = vadd.f32 %v295, %v397
        %v399 = vpop.f32.mrb[0].mxu0
        %v400 = vadd.f32 %v291, %v399
        %v401 = vpop.f32.mrb[0].mxu0
        %v402 = vadd.f32 %v295, %v401
        %403 = vmatprep.mubr.bf16.mxu0 0
        %404 = vmatmul.mubr.bf16.gmra.mrb[0].mxu0 %v353
        %v405 = vpop.f32.mrb[0].mxu0
        %v406 = vadd.f32 %v291, %v405
        %v407 = vpop.f32.mrb[0].mxu0
        %v408 = vadd.f32 %v295, %v407
        %v409 = vpop.f32.mrb[0].mxu0
        %v410 = vadd.f32 %v291, %v409
        %v411 = vpop.f32.mrb[0].mxu0
        %v412 = vadd.f32 %v295, %v411
        %413 = vmatprep.mubr.bf16.mxu0 0
        %414 = vmatmul.mubr.bf16.gmra.mrb[0].mxu0 %v356
        %v415 = vpop.f32.mrb[0].mxu0
        %v416 = vadd.f32 %v291, %v415
        %v417 = vpop.f32.mrb[0].mxu0
        %v418 = vadd.f32 %v295, %v417
        %v419 = vpop.f32.mrb[0].mxu0
        %v420 = vadd.f32 %v291, %v419
        %v421 = vpop.f32.mrb[0].mxu0
        %v422 = vadd.f32 %v295, %v421
        %423 = vmatprep.mubr.bf16.mxu0 0
        %424 = vmatmul.mubr.bf16.gmra.mrb[0].mxu0 %v359
        %v425 = vpop.f32.mrb[0].mxu0
        %v426 = vadd.f32 %v291, %v425
        %v427 = vpop.f32.mrb[0].mxu0
        %v428 = vadd.f32 %v295, %v427
        %v429 = vpop.f32.mrb[0].mxu0
        %v430 = vadd.f32 %v291, %v429
        %v431 = vpop.f32.mrb[0].mxu0
        %v432 = vadd.f32 %v295, %v431
        %433 = vdwg.mxu0
        %434 = vmatprep.subr.bf16.mxu0 %v343
        %435 = vmatpush1.bf16.msra.mxu0 %v342
        %436 = vmatprep.subr.bf16.mxu0 0
        %437 = vmatpush1.bf16.msra.mxu0 0
        %438 = vmatprep.subr.bf16.mxu0 0
        %439 = vmatpush1.bf16.msra.mxu0 0
        %440 = vmatprep.subr.bf16.mxu0 0
        %441 = vmatpush1.bf16.msra.mxu0 0
        %442 = vmatprep.subr.bf16.mxu0 0
        %443 = vmatpush1.bf16.msra.mxu0 0
        %444 = vmatprep.subr.bf16.mxu0 0
        %445 = vmatpush1.bf16.msra.mxu0 0
        %446 = vmatprep.subr.bf16.mxu0 0
        %447 = vmatpush1.bf16.msra.mxu0 0
        %448 = vmatprep.subr.bf16.mxu0 0
        %449 = vmatpush1.bf16.msra.mxu0 0
        %450 = vmatprep.subr.bf16.mxu0 0
        %451 = vmatpush1.bf16.msra.mxu0 0
        %452 = vmatprep.subr.bf16.mxu0 0
        %453 = vmatpush1.bf16.msra.mxu0 0
        %454 = vmatprep.subr.bf16.mxu0 0
        %455 = vmatpush1.bf16.msra.mxu0 0
        %456 = vmatprep.subr.bf16.mxu0 0
        %457 = vmatpush1.bf16.msra.mxu0 0
        %458 = vmatprep.subr.bf16.mxu0 0
        %459 = vmatpush1.bf16.msra.mxu0 0
        %460 = vmatprep.subr.bf16.mxu0 0
        %461 = vmatpush1.bf16.msra.mxu0 0
        %462 = vmatprep.subr.bf16.mxu0 0
        %463 = vmatpush1.bf16.msra.mxu0 0
        %464 = vmatprep.subr.bf16.mxu0 0
        %465 = vmatpush1.bf16.msra.mxu0 0
        %466 = vmatprep.mubr.bf16.mxu0 0
        %467 = vmatmul.mubr.bf16.gmra.mrb[0].mxu0 %v350
        %v468 = vpop.f32.mrb[0].mxu0
        %v469 = vadd.f32 %v299, %v468
        %v470 = vpop.f32.mrb[0].mxu0
        %v471 = vadd.f32 %v303, %v470
        %v472 = vpop.f32.mrb[0].mxu0
        %v473 = vadd.f32 %v299, %v472
        %v474 = vpop.f32.mrb[0].mxu0
        %v475 = vadd.f32 %v303, %v474
        %476 = vmatprep.mubr.bf16.mxu0 0
        %477 = vmatmul.mubr.bf16.gmra.mrb[0].mxu0 %v353
        %v478 = vpop.f32.mrb[0].mxu0
        %v479 = vadd.f32 %v299, %v478
        %v480 = vpop.f32.mrb[0].mxu0
        %v481 = vadd.f32 %v303, %v480
        %v482 = vpop.f32.mrb[0].mxu0
        %v483 = vadd.f32 %v299, %v482
        %v484 = vpop.f32.mrb[0].mxu0
        %v485 = vadd.f32 %v303, %v484
        %486 = vmatprep.mubr.bf16.mxu0 0
        %487 = vmatmul.mubr.bf16.gmra.mrb[0].mxu0 %v356
        %v488 = vpop.f32.mrb[0].mxu0
        %v489 = vadd.f32 %v299, %v488
        %v490 = vpop.f32.mrb[0].mxu0
        %v491 = vadd.f32 %v303, %v490
        %v492 = vpop.f32.mrb[0].mxu0
        %v493 = vadd.f32 %v299, %v492
        %v494 = vpop.f32.mrb[0].mxu0
        %v495 = vadd.f32 %v303, %v494
        %496 = vmatprep.mubr.bf16.mxu0 0
        %497 = vmatmul.mubr.bf16.gmra.mrb[0].mxu0 %v359
        %v498 = vpop.f32.mrb[0].mxu0
        %v499 = vadd.f32 %v299, %v498
        %v500 = vpop.f32.mrb[0].mxu0
        %v501 = vadd.f32 %v303, %v500
        %v502 = vpop.f32.mrb[0].mxu0
        %v503 = vadd.f32 %v299, %v502
        %v504 = vpop.f32.mrb[0].mxu0
        %v505 = vadd.f32 %v303, %v504
        %506 = vdwg.mxu0
        %507 = vst [vmem:[#allocation2] sm:$0xff] %v396
        %508 = vst [vmem:[#allocation2 + $0x8] sm:$0xff] %v398
        %509 = vst [vmem:[#allocation2 + $0x10] sm:$0xff] %v469
        %510 = vst [vmem:[#allocation2 + $0x18] sm:$0xff] %v471
        %511 = vst [vmem:[#allocation2 + $0x20] sm:$0xff] %v400
        %512 = vst [vmem:[#allocation2 + $0x28] sm:$0xff] %v402
        %513 = vst [vmem:[#allocation2 + $0x30] sm:$0xff] %v473
        %514 = vst [vmem:[#allocation2 + $0x38] sm:$0xff] %v475
        %515 = vst [vmem:[#allocation2 + $0x40] sm:$0xff] %v406
        %516 = vst [vmem:[#allocation2 + $0x48] sm:$0xff] %v408
        %517 = vst [vmem:[#allocation2 + $0x50] sm:$0xff] %v479
        %518 = vst [vmem:[#allocation2 + $0x58] sm:$0xff] %v481
        %519 = vst [vmem:[#allocation2 + $0x60] sm:$0xff] %v410
        %520 = vst [vmem:[#allocation2 + $0x68] sm:$0xff] %v412
        %521 = vst [vmem:[#allocation2 + $0x70] sm:$0xff] %v483
        %522 = vst [vmem:[#allocation2 + $0x78] sm:$0xff] %v485
        %523 = vst [vmem:[#allocation2 + $0x80] sm:$0xff] %v416
        %524 = vst [vmem:[#allocation2 + $0x88] sm:$0xff] %v418
        %525 = vst [vmem:[#allocation2 + $0x90] sm:$0xff] %v489
        %526 = vst [vmem:[#allocation2 + $0x98] sm:$0xff] %v491
        %527 = vst [vmem:[#allocation2 + $0xa0] sm:$0xff] %v420
        %528 = vst [vmem:[#allocation2 + $0xa8] sm:$0xff] %v422
        %529 = vst [vmem:[#allocation2 + $0xb0] sm:$0xff] %v493
        %530 = vst [vmem:[#allocation2 + $0xb8] sm:$0xff] %v495
        %531 = vst [vmem:[#allocation2 + $0xc0] sm:$0xff] %v426
        %532 = vst [vmem:[#allocation2 + $0xc8] sm:$0xff] %v428
        %533 = vst [vmem:[#allocation2 + $0xd0] sm:$0xff] %v499
        %534 = vst [vmem:[#allocation2 + $0xd8] sm:$0xff] %v501
        %535 = vst [vmem:[#allocation2 + $0xe0] sm:$0xff] %v430
        %536 = vst [vmem:[#allocation2 + $0xe8] sm:$0xff] %v432
        %537 = vst [vmem:[#allocation2 + $0xf0] sm:$0xff] %v503
        %538 = vst [vmem:[#allocation2 + $0xf8] sm:$0xff] %v505
        %v539 = vld [vmem:[%s235] sm:$0xff]
        %v540 = vld [vmem:[%s235 + $0x8] sm:$0xff]
        %v541 = vld [vmem:[%s235 + $0x10] sm:$0xff]
        %v542 = vld [vmem:[%s235 + $0x18] sm:$0xff]
        %v543 = vld [vmem:[%s235 + $0x20] sm:$0xff]
        %v544 = vld [vmem:[%s235 + $0x28] sm:$0xff]
        %v545 = vld [vmem:[%s235 + $0x30] sm:$0xff]
        %v546 = vld [vmem:[%s235 + $0x38] sm:$0xff]
        %v547 = vld [vmem:[%s235 + $0x40] sm:$0xff]
        %v548 = vld [vmem:[%s235 + $0x48] sm:$0xff]
        %v549 = vld [vmem:[%s235 + $0x50] sm:$0xff]
        %v550 = vld [vmem:[%s235 + $0x58] sm:$0xff]
        %v551 = vld [vmem:[%s235 + $0x60] sm:$0xff]
        %v552 = vld [vmem:[%s235 + $0x68] sm:$0xff]
        %v553 = vld [vmem:[%s235 + $0x70] sm:$0xff]
        %v554 = vld [vmem:[%s235 + $0x78] sm:$0xff]
        %v555 = vld [vmem:[%s235 + $0x80] sm:$0xff]
        %v556 = vld [vmem:[%s235 + $0x88] sm:$0xff]
        %v557 = vld [vmem:[%s235 + $0x90] sm:$0xff]
        %v558 = vld [vmem:[%s235 + $0x98] sm:$0xff]
        %v559 = vld [vmem:[%s235 + $0xa0] sm:$0xff]
        %v560 = vld [vmem:[%s235 + $0xa8] sm:$0xff]
        %v561 = vld [vmem:[%s235 + $0xb0] sm:$0xff]
        %v562 = vld [vmem:[%s235 + $0xb8] sm:$0xff]
        %v563 = vld [vmem:[%s235 + $0xc0] sm:$0xff]
        %v564 = vld [vmem:[%s235 + $0xc8] sm:$0xff]
        %v565 = vld [vmem:[%s235 + $0xd0] sm:$0xff]
        %v566 = vld [vmem:[%s235 + $0xd8] sm:$0xff]
        %v567 = vld [vmem:[%s235 + $0xe0] sm:$0xff]
        %v568 = vld [vmem:[%s235 + $0xe8] sm:$0xff]
        %v569 = vld [vmem:[%s235 + $0xf0] sm:$0xff]
        %v570 = vld [vmem:[%s235 + $0xf8] sm:$0xff]
        %p571 = scmp.eq.s32.totalorder %s24, 0
        %s572 = scalar_select %p571, 0, 7
        %s573 = smul.u32 %s572, 8
        %s574 = sshra.s32 %s573, 3
        %s575 = sand.u32 %s573, 7
        %s576 = smul.u32 %s574, 4
        %s577 = smul.addr %s576, 8
        %s578 = scalar_lea.vmem [#allocation2], %s577
        %v579 = vld [vmem:[%s578] sm:$0xff]
        %v580 = vld [vmem:[%s578 + $0x8] sm:$0xff]
        %v581 = vld [vmem:[%s578 + $0x10] sm:$0xff]
        %v582 = vld [vmem:[%s578 + $0x18] sm:$0xff]
        %v615 = vunpack.c.l.b16 %v539
        %v616 = vunpack.c.h.b16 %v539
        %v617 = vunpack.c.l.b16 %v540
        %v618 = vunpack.c.h.b16 %v540
        %v619 = vunpack.c.l.b16 %v541
        %v620 = vunpack.c.h.b16 %v541
        %v621 = vunpack.c.l.b16 %v542
        %v622 = vunpack.c.h.b16 %v542
        %v623 = vunpack.c.l.b16 %v543
        %v624 = vunpack.c.h.b16 %v543
        %v625 = vunpack.c.l.b16 %v544
        %v626 = vunpack.c.h.b16 %v544
        %v627 = vunpack.c.l.b16 %v545
        %v628 = vunpack.c.h.b16 %v545
        %v629 = vunpack.c.l.b16 %v546
        %v630 = vunpack.c.h.b16 %v546
        %v631 = vunpack.c.l.b16 %v547
        %v632 = vunpack.c.h.b16 %v547
        %v633 = vunpack.c.l.b16 %v548
        %v634 = vunpack.c.h.b16 %v548
        %v635 = vunpack.c.l.b16 %v549
        %v636 = vunpack.c.h.b16 %v549
        %v637 = vunpack.c.l.b16 %v550
        %v638 = vunpack.c.h.b16 %v550
        %v639 = vunpack.c.l.b16 %v551
        %v640 = vunpack.c.h.b16 %v551
        %v641 = vunpack.c.l.b16 %v552
        %v642 = vunpack.c.h.b16 %v552
        %v643 = vunpack.c.l.b16 %v553
        %v644 = vunpack.c.h.b16 %v553
        %v645 = vunpack.c.l.b16 %v554
        %v646 = vunpack.c.h.b16 %v554
        %v647 = vunpack.c.l.b16 %v555
        %v648 = vunpack.c.h.b16 %v555
        %v649 = vunpack.c.l.b16 %v556
        %v650 = vunpack.c.h.b16 %v556
        %v651 = vunpack.c.l.b16 %v557
        %v652 = vunpack.c.h.b16 %v557
        %v653 = vunpack.c.l.b16 %v558
        %v654 = vunpack.c.h.b16 %v558
        %v655 = vunpack.c.l.b16 %v559
        %v656 = vunpack.c.h.b16 %v559
        %v657 = vunpack.c.l.b16 %v560
        %v658 = vunpack.c.h.b16 %v560
        %v659 = vunpack.c.l.b16 %v561
        %v660 = vunpack.c.h.b16 %v561
        %v661 = vunpack.c.l.b16 %v562
        %v662 = vunpack.c.h.b16 %v562
        %v663 = vunpack.c.l.b16 %v563
        %v664 = vunpack.c.h.b16 %v563
        %v665 = vunpack.c.l.b16 %v564
        %v666 = vunpack.c.h.b16 %v564
        %v667 = vunpack.c.l.b16 %v565
        %v668 = vunpack.c.h.b16 %v565
        %v669 = vunpack.c.l.b16 %v566
        %v670 = vunpack.c.h.b16 %v566
        %v671 = vunpack.c.l.b16 %v567
        %v672 = vunpack.c.h.b16 %v567
        %v673 = vunpack.c.l.b16 %v568
        %v674 = vunpack.c.h.b16 %v568
        %v675 = vunpack.c.l.b16 %v569
        %v676 = vunpack.c.h.b16 %v569
        %v677 = vunpack.c.l.b16 %v570
        %v678 = vunpack.c.h.b16 %v570
        %v679 = vpack.c.b16 %v619, %v615
        %v680 = vpack.c.b16 %v620, %v616
        %v681 = vpack.c.b16 %v621, %v617
        %v682 = vpack.c.b16 %v622, %v618
        %v683 = vpack.c.b16 %v627, %v623
        %v684 = vpack.c.b16 %v628, %v624
        %v685 = vpack.c.b16 %v629, %v625
        %v686 = vpack.c.b16 %v630, %v626
        %v687 = vpack.c.b16 %v635, %v631
        %v688 = vpack.c.b16 %v636, %v632
        %v689 = vpack.c.b16 %v637, %v633
        %v690 = vpack.c.b16 %v638, %v634
        %v691 = vpack.c.b16 %v643, %v639
        %v692 = vpack.c.b16 %v644, %v640
        %v693 = vpack.c.b16 %v645, %v641
        %v694 = vpack.c.b16 %v646, %v642
        %v695 = vpack.c.b16 %v651, %v647
        %v696 = vpack.c.b16 %v652, %v648
        %v697 = vpack.c.b16 %v653, %v649
        %v698 = vpack.c.b16 %v654, %v650
        %v699 = vpack.c.b16 %v659, %v655
        %v700 = vpack.c.b16 %v660, %v656
        %v701 = vpack.c.b16 %v661, %v657
        %v702 = vpack.c.b16 %v662, %v658
        %v703 = vpack.c.b16 %v667, %v663
        %v704 = vpack.c.b16 %v668, %v664
        %v705 = vpack.c.b16 %v669, %v665
        %v706 = vpack.c.b16 %v670, %v666
        %v707 = vpack.c.b16 %v675, %v671
        %v708 = vpack.c.b16 %v676, %v672
        %v709 = vpack.c.b16 %v677, %v673
        %v710 = vpack.c.b16 %v678, %v674
        %743 = vmatprep.subr.bf16.mxu0 %v680
        %744 = vmatpush1.bf16.msra.mxu0 %v679
        %745 = vmatprep.subr.bf16.mxu0 %v684
        %746 = vmatpush1.bf16.msra.mxu0 %v683
        %747 = vmatprep.subr.bf16.mxu0 %v688
        %748 = vmatpush1.bf16.msra.mxu0 %v687
        %749 = vmatprep.subr.bf16.mxu0 %v692
        %750 = vmatpush1.bf16.msra.mxu0 %v691
        %751 = vmatprep.subr.bf16.mxu0 %v696
        %752 = vmatpush1.bf16.msra.mxu0 %v695
        %753 = vmatprep.subr.bf16.mxu0 %v700
        %754 = vmatpush1.bf16.msra.mxu0 %v699
        %755 = vmatprep.subr.bf16.mxu0 %v704
        %756 = vmatpush1.bf16.msra.mxu0 %v703
        %757 = vmatprep.subr.bf16.mxu0 %v708
        %758 = vmatpush1.bf16.msra.mxu0 %v707
        %759 = vmatprep.subr.bf16.mxu0 0
        %760 = vmatpush1.bf16.msra.mxu0 0
        %761 = vmatprep.subr.bf16.mxu0 0
        %762 = vmatpush1.bf16.msra.mxu0 0
        %763 = vmatprep.subr.bf16.mxu0 0
        %764 = vmatpush1.bf16.msra.mxu0 0
        %765 = vmatprep.subr.bf16.mxu0 0
        %766 = vmatpush1.bf16.msra.mxu0 0
        %767 = vmatprep.subr.bf16.mxu0 0
        %768 = vmatpush1.bf16.msra.mxu0 0
        %769 = vmatprep.subr.bf16.mxu0 0
        %770 = vmatpush1.bf16.msra.mxu0 0
        %771 = vmatprep.subr.bf16.mxu0 0
        %772 = vmatpush1.bf16.msra.mxu0 0
        %773 = vmatprep.subr.bf16.mxu0 0
        %774 = vmatpush1.bf16.msra.mxu0 0
        %775 = vmatprep.mubr.bf16.mxu0 0
        %776 = vmatmul.mubr.bf16.gmra.mrb[0].mxu0 0
        %v777 = vpop.f32.mrb[0].mxu0
        %v778 = vadd.f32 0.0, %v777
        %v779 = vpop.f32.mrb[0].mxu0
        %v780 = vadd.f32 0.0, %v779
        %v781 = vpop.f32.mrb[0].mxu0
        %v782 = vpop.f32.mrb[0].mxu0
        %783 = vdwg.mxu0
        %784 = vmatprep.subr.bf16.mxu0 %v682
        %785 = vmatpush1.bf16.msra.mxu0 %v681
        %786 = vmatprep.subr.bf16.mxu0 %v686
        %787 = vmatpush1.bf16.msra.mxu0 %v685
        %788 = vmatprep.subr.bf16.mxu0 %v690
        %789 = vmatpush1.bf16.msra.mxu0 %v689
        %790 = vmatprep.subr.bf16.mxu0 %v694
        %791 = vmatpush1.bf16.msra.mxu0 %v693
        %792 = vmatprep.subr.bf16.mxu0 %v698
        %793 = vmatpush1.bf16.msra.mxu0 %v697
        %794 = vmatprep.subr.bf16.mxu0 %v702
        %795 = vmatpush1.bf16.msra.mxu0 %v701
        %796 = vmatprep.subr.bf16.mxu0 %v706
        %797 = vmatpush1.bf16.msra.mxu0 %v705
        %798 = vmatprep.subr.bf16.mxu0 %v710
        %799 = vmatpush1.bf16.msra.mxu0 %v709
        %800 = vmatprep.subr.bf16.mxu0 0
        %801 = vmatpush1.bf16.msra.mxu0 0
        %802 = vmatprep.subr.bf16.mxu0 0
        %803 = vmatpush1.bf16.msra.mxu0 0
        %804 = vmatprep.subr.bf16.mxu0 0
        %805 = vmatpush1.bf16.msra.mxu0 0
        %806 = vmatprep.subr.bf16.mxu0 0
        %807 = vmatpush1.bf16.msra.mxu0 0
        %808 = vmatprep.subr.bf16.mxu0 0
        %809 = vmatpush1.bf16.msra.mxu0 0
        %810 = vmatprep.subr.bf16.mxu0 0
        %811 = vmatpush1.bf16.msra.mxu0 0
        %812 = vmatprep.subr.bf16.mxu0 0
        %813 = vmatpush1.bf16.msra.mxu0 0
        %814 = vmatprep.subr.bf16.mxu0 0
        %815 = vmatpush1.bf16.msra.mxu0 0
        %816 = vmatprep.mubr.bf16.mxu0 0
        %817 = vmatmul.mubr.bf16.gmra.mrb[0].mxu0 0
        %v818 = vpop.f32.mrb[0].mxu0
        %v819 = vadd.f32 0.0, %v818
        %v820 = vpop.f32.mrb[0].mxu0
        %v821 = vadd.f32 0.0, %v820
        %v822 = vpop.f32.mrb[0].mxu0
        %v823 = vpop.f32.mrb[0].mxu0
        %824 = vdwg.mxu0
        %v825 = vadd.f32 %v579, %v778
        %v826 = vadd.f32 %v580, %v780
        %v827 = vadd.f32 %v581, %v819
        %v828 = vadd.f32 %v582, %v821
        %v829 = vxor.u32 %v825, 2147483648
        %v830 = vmul.f32 %v829, 1.442695
        %v831 = vpow.pop %v830
        %v832 = vadd.f32 %v831, 1.0
        %v833 = vrcp.pop %v832
        %v834 = vmul.f32 1.0, %v833
        %v835 = vxor.u32 %v826, 2147483648
        %v836 = vmul.f32 %v835, 1.442695
        %v837 = vpow.pop %v836
        %v838 = vadd.f32 %v837, 1.0
        %v839 = vrcp.pop %v838
        %v840 = vmul.f32 1.0, %v839
        %v841 = vtanh.pop %v827
        %v842 = vxor.u32 %v828, 2147483648
        %v843 = vmul.f32 %v842, 1.442695
        %v844 = vpow.pop %v843
        %v845 = vadd.f32 %v844, 1.0
        %v846 = vrcp.pop %v845
        %v847 = vmul.f32 1.0, %v846
        %v848 = vmul.f32 %v840, 0.0
        %v849 = vmul.f32 %v834, %v841
        %v850 = vadd.f32 %v848, %v849
        %v851 = vtanh.pop %v850
        %v852 = vmul.f32 %v847, %v851
        %s853 = scalar_lea.vmem [#allocation3], %s573
        %854 = vst [vmem:[%s853] sm:$0xff] %v852
        %s855 = scalar_select %p571, 1, 6
        %s856 = smul.u32 %s855, 8
        %s857 = sshra.s32 %s856, 3
        %s858 = sand.u32 %s856, 7
        %s859 = smul.u32 %s857, 4
        %s860 = smul.addr %s859, 8
        %s861 = scalar_lea.vmem [#allocation2], %s860
        %v862 = vld [vmem:[%s861] sm:$0xff]
        %v863 = vld [vmem:[%s861 + $0x8] sm:$0xff]
        %v864 = vld [vmem:[%s861 + $0x10] sm:$0xff]
        %v865 = vld [vmem:[%s861 + $0x18] sm:$0xff]
        %v866 = vpack.c.bf16 %v852, %v852
        %867 = vmatprep.subr.bf16.mxu0 %v680
        %868 = vmatpush1.bf16.msra.mxu0 %v679
        %869 = vmatprep.subr.bf16.mxu0 %v684
        %870 = vmatpush1.bf16.msra.mxu0 %v683
        %871 = vmatprep.subr.bf16.mxu0 %v688
        %872 = vmatpush1.bf16.msra.mxu0 %v687
        %873 = vmatprep.subr.bf16.mxu0 %v692
        %874 = vmatpush1.bf16.msra.mxu0 %v691
        %875 = vmatprep.subr.bf16.mxu0 %v696
        %876 = vmatpush1.bf16.msra.mxu0 %v695
        %877 = vmatprep.subr.bf16.mxu0 %v700
        %878 = vmatpush1.bf16.msra.mxu0 %v699
        %879 = vmatprep.subr.bf16.mxu0 %v704
        %880 = vmatpush1.bf16.msra.mxu0 %v703
        %881 = vmatprep.subr.bf16.mxu0 %v708
        %882 = vmatpush1.bf16.msra.mxu0 %v707
        %883 = vmatprep.subr.bf16.mxu0 0
        %884 = vmatpush1.bf16.msra.mxu0 0
        %885 = vmatprep.subr.bf16.mxu0 0
        %886 = vmatpush1.bf16.msra.mxu0 0
        %887 = vmatprep.subr.bf16.mxu0 0
        %888 = vmatpush1.bf16.msra.mxu0 0
        %889 = vmatprep.subr.bf16.mxu0 0
        %890 = vmatpush1.bf16.msra.mxu0 0
        %891 = vmatprep.subr.bf16.mxu0 0
        %892 = vmatpush1.bf16.msra.mxu0 0
        %893 = vmatprep.subr.bf16.mxu0 0
        %894 = vmatpush1.bf16.msra.mxu0 0
        %895 = vmatprep.subr.bf16.mxu0 0
        %896 = vmatpush1.bf16.msra.mxu0 0
        %897 = vmatprep.subr.bf16.mxu0 0
        %898 = vmatpush1.bf16.msra.mxu0 0
        %899 = vmatprep.mubr.bf16.mxu0 0
        %900 = vmatmul.mubr.bf16.gmra.mrb[0].mxu0 %v866
        %v901 = vpop.f32.mrb[0].mxu0
        %v902 = vadd.f32 0.0, %v901
        %v903 = vpop.f32.mrb[0].mxu0
        %v904 = vadd.f32 0.0, %v903
        %v905 = vpop.f32.mrb[0].mxu0
        %v906 = vpop.f32.mrb[0].mxu0
        %907 = vdwg.mxu0
        %908 = vmatprep.subr.bf16.mxu0 %v682
        %909 = vmatpush1.bf16.msra.mxu0 %v681
        %910 = vmatprep.subr.bf16.mxu0 %v686
        %911 = vmatpush1.bf16.msra.mxu0 %v685
        %912 = vmatprep.subr.bf16.mxu0 %v690
        %913 = vmatpush1.bf16.msra.mxu0 %v689
        %914 = vmatprep.subr.bf16.mxu0 %v694
        %915 = vmatpush1.bf16.msra.mxu0 %v693
        %916 = vmatprep.subr.bf16.mxu0 %v698
        %917 = vmatpush1.bf16.msra.mxu0 %v697
        %918 = vmatprep.subr.bf16.mxu0 %v702
        %919 = vmatpush1.bf16.msra.mxu0 %v701
        %920 = vmatprep.subr.bf16.mxu0 %v706
        %921 = vmatpush1.bf16.msra.mxu0 %v705
        %922 = vmatprep.subr.bf16.mxu0 %v710
        %923 = vmatpush1.bf16.msra.mxu0 %v709
        %924 = vmatprep.subr.bf16.mxu0 0
        %925 = vmatpush1.bf16.msra.mxu0 0
        %926 = vmatprep.subr.bf16.mxu0 0
        %927 = vmatpush1.bf16.msra.mxu0 0
        %928 = vmatprep.subr.bf16.mxu0 0
        %929 = vmatpush1.bf16.msra.mxu0 0
        %930 = vmatprep.subr.bf16.mxu0 0
        %931 = vmatpush1.bf16.msra.mxu0 0
        %932 = vmatprep.subr.bf16.mxu0 0
        %933 = vmatpush1.bf16.msra.mxu0 0
        %934 = vmatprep.subr.bf16.mxu0 0
        %935 = vmatpush1.bf16.msra.mxu0 0
        %936 = vmatprep.subr.bf16.mxu0 0
        %937 = vmatpush1.bf16.msra.mxu0 0
        %938 = vmatprep.subr.bf16.mxu0 0
        %939 = vmatpush1.bf16.msra.mxu0 0
        %940 = vmatprep.mubr.bf16.mxu0 0
        %941 = vmatmul.mubr.bf16.gmra.mrb[0].mxu0 %v866
        %v942 = vpop.f32.mrb[0].mxu0
        %v943 = vadd.f32 0.0, %v942
        %v944 = vpop.f32.mrb[0].mxu0
        %v945 = vadd.f32 0.0, %v944
        %v946 = vpop.f32.mrb[0].mxu0
        %v947 = vpop.f32.mrb[0].mxu0
        %948 = vdwg.mxu0
        %v949 = vadd.f32 %v862, %v902
        %v950 = vadd.f32 %v863, %v904
        %v951 = vadd.f32 %v864, %v943
        %v952 = vadd.f32 %v865, %v945
        %v953 = vxor.u32 %v949, 2147483648
        %v954 = vmul.f32 %v953, 1.442695
        %v955 = vpow.pop %v954
        %v956 = vadd.f32 %v955, 1.0
        %v957 = vrcp.pop %v956
        %v958 = vmul.f32 1.0, %v957
        %v959 = vxor.u32 %v950, 2147483648
        %v960 = vmul.f32 %v959, 1.442695
        %v961 = vpow.pop %v960
        %v962 = vadd.f32 %v961, 1.0
        %v963 = vrcp.pop %v962
        %v964 = vmul.f32 1.0, %v963
        %v965 = vtanh.pop %v951
        %v966 = vxor.u32 %v952, 2147483648
        %v967 = vmul.f32 %v966, 1.442695
        %v968 = vpow.pop %v967
        %v969 = vadd.f32 %v968, 1.0
        %v970 = vrcp.pop %v969
        %v971 = vmul.f32 1.0, %v970
        %v972 = vmul.f32 %v964, %v850
        %v973 = vmul.f32 %v958, %v965
        %v974 = vadd.f32 %v972, %v973
        %v975 = vtanh.pop %v974
        %v976 = vmul.f32 %v971, %v975
        %s977 = scalar_lea.vmem [#allocation3], %s856
        %978 = vst [vmem:[%s977] sm:$0xff] %v976
        %s979 = scalar_select %p571, 2, 5
        %s980 = smul.u32 %s979, 8
        %s981 = sshra.s32 %s980, 3
        %s982 = sand.u32 %s980, 7
        %s983 = smul.u32 %s981, 4
        %s984 = smul.addr %s983, 8
        %s985 = scalar_lea.vmem [#allocation2], %s984
        %v986 = vld [vmem:[%s985] sm:$0xff]
        %v987 = vld [vmem:[%s985 + $0x8] sm:$0xff]
        %v988 = vld [vmem:[%s985 + $0x10] sm:$0xff]
        %v989 = vld [vmem:[%s985 + $0x18] sm:$0xff]
        %v990 = vpack.c.bf16 %v976, %v976
        %991 = vmatprep.subr.bf16.mxu0 %v680
        %992 = vmatpush1.bf16.msra.mxu0 %v679
        %993 = vmatprep.subr.bf16.mxu0 %v684
        %994 = vmatpush1.bf16.msra.mxu0 %v683
        %995 = vmatprep.subr.bf16.mxu0 %v688
        %996 = vmatpush1.bf16.msra.mxu0 %v687
        %997 = vmatprep.subr.bf16.mxu0 %v692
        %998 = vmatpush1.bf16.msra.mxu0 %v691
        %999 = vmatprep.subr.bf16.mxu0 %v696
        %1000 = vmatpush1.bf16.msra.mxu0 %v695
        %1001 = vmatprep.subr.bf16.mxu0 %v700
        %1002 = vmatpush1.bf16.msra.mxu0 %v699
        %1003 = vmatprep.subr.bf16.mxu0 %v704
        %1004 = vmatpush1.bf16.msra.mxu0 %v703
        %1005 = vmatprep.subr.bf16.mxu0 %v708
        %1006 = vmatpush1.bf16.msra.mxu0 %v707
        %1007 = vmatprep.subr.bf16.mxu0 0
        %1008 = vmatpush1.bf16.msra.mxu0 0
        %1009 = vmatprep.subr.bf16.mxu0 0
        %1010 = vmatpush1.bf16.msra.mxu0 0
        %1011 = vmatprep.subr.bf16.mxu0 0
        %1012 = vmatpush1.bf16.msra.mxu0 0
        %1013 = vmatprep.subr.bf16.mxu0 0
        %1014 = vmatpush1.bf16.msra.mxu0 0
        %1015 = vmatprep.subr.bf16.mxu0 0
        %1016 = vmatpush1.bf16.msra.mxu0 0
        %1017 = vmatprep.subr.bf16.mxu0 0
        %1018 = vmatpush1.bf16.msra.mxu0 0
        %1019 = vmatprep.subr.bf16.mxu0 0
        %1020 = vmatpush1.bf16.msra.mxu0 0
        %1021 = vmatprep.subr.bf16.mxu0 0
        %1022 = vmatpush1.bf16.msra.mxu0 0
        %1023 = vmatprep.mubr.bf16.mxu0 0
        %1024 = vmatmul.mubr.bf16.gmra.mrb[0].mxu0 %v990
        %v1025 = vpop.f32.mrb[0].mxu0
        %v1026 = vadd.f32 0.0, %v1025
        %v1027 = vpop.f32.mrb[0].mxu0
        %v1028 = vadd.f32 0.0, %v1027
        %v1029 = vpop.f32.mrb[0].mxu0
        %v1030 = vpop.f32.mrb[0].mxu0
        %1031 = vdwg.mxu0
        %1032 = vmatprep.subr.bf16.mxu0 %v682
        %1033 = vmatpush1.bf16.msra.mxu0 %v681
        %1034 = vmatprep.subr.bf16.mxu0 %v686
        %1035 = vmatpush1.bf16.msra.mxu0 %v685
        %1036 = vmatprep.subr.bf16.mxu0 %v690
        %1037 = vmatpush1.bf16.msra.mxu0 %v689
        %1038 = vmatprep.subr.bf16.mxu0 %v694
        %1039 = vmatpush1.bf16.msra.mxu0 %v693
        %1040 = vmatprep.subr.bf16.mxu0 %v698
        %1041 = vmatpush1.bf16.msra.mxu0 %v697
        %1042 = vmatprep.subr.bf16.mxu0 %v702
        %1043 = vmatpush1.bf16.msra.mxu0 %v701
        %1044 = vmatprep.subr.bf16.mxu0 %v706
        %1045 = vmatpush1.bf16.msra.mxu0 %v705
        %1046 = vmatprep.subr.bf16.mxu0 %v710
        %1047 = vmatpush1.bf16.msra.mxu0 %v709
        %1048 = vmatprep.subr.bf16.mxu0 0
        %1049 = vmatpush1.bf16.msra.mxu0 0
        %1050 = vmatprep.subr.bf16.mxu0 0
        %1051 = vmatpush1.bf16.msra.mxu0 0
        %1052 = vmatprep.subr.bf16.mxu0 0
        %1053 = vmatpush1.bf16.msra.mxu0 0
        %1054 = vmatprep.subr.bf16.mxu0 0
        %1055 = vmatpush1.bf16.msra.mxu0 0
        %1056 = vmatprep.subr.bf16.mxu0 0
        %1057 = vmatpush1.bf16.msra.mxu0 0
        %1058 = vmatprep.subr.bf16.mxu0 0
        %1059 = vmatpush1.bf16.msra.mxu0 0
        %1060 = vmatprep.subr.bf16.mxu0 0
        %1061 = vmatpush1.bf16.msra.mxu0 0
        %1062 = vmatprep.subr.bf16.mxu0 0
        %1063 = vmatpush1.bf16.msra.mxu0 0
        %1064 = vmatprep.mubr.bf16.mxu0 0
        %1065 = vmatmul.mubr.bf16.gmra.mrb[0].mxu0 %v990
        %v1066 = vpop.f32.mrb[0].mxu0
        %v1067 = vadd.f32 0.0, %v1066
        %v1068 = vpop.f32.mrb[0].mxu0
        %v1069 = vadd.f32 0.0, %v1068
        %v1070 = vpop.f32.mrb[0].mxu0
        %v1071 = vpop.f32.mrb[0].mxu0
        %1072 = vdwg.mxu0
        %v1073 = vadd.f32 %v986, %v1026
        %v1074 = vadd.f32 %v987, %v1028
        %v1075 = vadd.f32 %v988, %v1067
        %v1076 = vadd.f32 %v989, %v1069
        %v1077 = vxor.u32 %v1073, 2147483648
        %v1078 = vmul.f32 %v1077, 1.442695
        %v1079 = vpow.pop %v1078
        %v1080 = vadd.f32 %v1079, 1.0
        %v1081 = vrcp.pop %v1080
        %v1082 = vmul.f32 1.0, %v1081
        %v1083 = vxor.u32 %v1074, 2147483648
        %v1084 = vmul.f32 %v1083, 1.442695
        %v1085 = vpow.pop %v1084
        %v1086 = vadd.f32 %v1085, 1.0
        %v1087 = vrcp.pop %v1086
        %v1088 = vmul.f32 1.0, %v1087
        %v1089 = vtanh.pop %v1075
        %v1090 = vxor.u32 %v1076, 2147483648
        %v1091 = vmul.f32 %v1090, 1.442695
        %v1092 = vpow.pop %v1091
        %v1093 = vadd.f32 %v1092, 1.0
        %v1094 = vrcp.pop %v1093
        %v1095 = vmul.f32 1.0, %v1094
        %v1096 = vmul.f32 %v1088, %v974
        %v1097 = vmul.f32 %v1082, %v1089
        %v1098 = vadd.f32 %v1096, %v1097
        %v1099 = vtanh.pop %v1098
        %v1100 = vmul.f32 %v1095, %v1099
        %s1101 = scalar_lea.vmem [#allocation3], %s980
        %1102 = vst [vmem:[%s1101] sm:$0xff] %v1100
        %s1103 = scalar_select %p571, 3, 4
        %s1104 = smul.u32 %s1103, 8
        %s1105 = sshra.s32 %s1104, 3
        %s1106 = sand.u32 %s1104, 7
        %s1107 = smul.u32 %s1105, 4
        %s1108 = smul.addr %s1107, 8
        %s1109 = scalar_lea.vmem [#allocation2], %s1108
        %v1110 = vld [vmem:[%s1109] sm:$0xff]
        %v1111 = vld [vmem:[%s1109 + $0x8] sm:$0xff]
        %v1112 = vld [vmem:[%s1109 + $0x10] sm:$0xff]
        %v1113 = vld [vmem:[%s1109 + $0x18] sm:$0xff]
        %v1114 = vpack.c.bf16 %v1100, %v1100
        %1115 = vmatprep.subr.bf16.mxu0 %v680
        %1116 = vmatpush1.bf16.msra.mxu0 %v679
        %1117 = vmatprep.subr.bf16.mxu0 %v684
        %1118 = vmatpush1.bf16.msra.mxu0 %v683
        %1119 = vmatprep.subr.bf16.mxu0 %v688
        %1120 = vmatpush1.bf16.msra.mxu0 %v687
        %1121 = vmatprep.subr.bf16.mxu0 %v692
        %1122 = vmatpush1.bf16.msra.mxu0 %v691
        %1123 = vmatprep.subr.bf16.mxu0 %v696
        %1124 = vmatpush1.bf16.msra.mxu0 %v695
        %1125 = vmatprep.subr.bf16.mxu0 %v700
        %1126 = vmatpush1.bf16.msra.mxu0 %v699
        %1127 = vmatprep.subr.bf16.mxu0 %v704
        %1128 = vmatpush1.bf16.msra.mxu0 %v703
        %1129 = vmatprep.subr.bf16.mxu0 %v708
        %1130 = vmatpush1.bf16.msra.mxu0 %v707
        %1131 = vmatprep.subr.bf16.mxu0 0
        %1132 = vmatpush1.bf16.msra.mxu0 0
        %1133 = vmatprep.subr.bf16.mxu0 0
        %1134 = vmatpush1.bf16.msra.mxu0 0
        %1135 = vmatprep.subr.bf16.mxu0 0
        %1136 = vmatpush1.bf16.msra.mxu0 0
        %1137 = vmatprep.subr.bf16.mxu0 0
        %1138 = vmatpush1.bf16.msra.mxu0 0
        %1139 = vmatprep.subr.bf16.mxu0 0
        %1140 = vmatpush1.bf16.msra.mxu0 0
        %1141 = vmatprep.subr.bf16.mxu0 0
        %1142 = vmatpush1.bf16.msra.mxu0 0
        %1143 = vmatprep.subr.bf16.mxu0 0
        %1144 = vmatpush1.bf16.msra.mxu0 0
        %1145 = vmatprep.subr.bf16.mxu0 0
        %1146 = vmatpush1.bf16.msra.mxu0 0
        %1147 = vmatprep.mubr.bf16.mxu0 0
        %1148 = vmatmul.mubr.bf16.gmra.mrb[0].mxu0 %v1114
        %v1149 = vpop.f32.mrb[0].mxu0
        %v1150 = vadd.f32 0.0, %v1149
        %v1151 = vpop.f32.mrb[0].mxu0
        %v1152 = vadd.f32 0.0, %v1151
        %v1153 = vpop.f32.mrb[0].mxu0
        %v1154 = vpop.f32.mrb[0].mxu0
        %1155 = vdwg.mxu0
        %1156 = vmatprep.subr.bf16.mxu0 %v682
        %1157 = vmatpush1.bf16.msra.mxu0 %v681
        %1158 = vmatprep.subr.bf16.mxu0 %v686
        %1159 = vmatpush1.bf16.msra.mxu0 %v685
        %1160 = vmatprep.subr.bf16.mxu0 %v690
        %1161 = vmatpush1.bf16.msra.mxu0 %v689
        %1162 = vmatprep.subr.bf16.mxu0 %v694
        %1163 = vmatpush1.bf16.msra.mxu0 %v693
        %1164 = vmatprep.subr.bf16.mxu0 %v698
        %1165 = vmatpush1.bf16.msra.mxu0 %v697
        %1166 = vmatprep.subr.bf16.mxu0 %v702
        %1167 = vmatpush1.bf16.msra.mxu0 %v701
        %1168 = vmatprep.subr.bf16.mxu0 %v706
        %1169 = vmatpush1.bf16.msra.mxu0 %v705
        %1170 = vmatprep.subr.bf16.mxu0 %v710
        %1171 = vmatpush1.bf16.msra.mxu0 %v709
        %1172 = vmatprep.subr.bf16.mxu0 0
        %1173 = vmatpush1.bf16.msra.mxu0 0
        %1174 = vmatprep.subr.bf16.mxu0 0
        %1175 = vmatpush1.bf16.msra.mxu0 0
        %1176 = vmatprep.subr.bf16.mxu0 0
        %1177 = vmatpush1.bf16.msra.mxu0 0
        %1178 = vmatprep.subr.bf16.mxu0 0
        %1179 = vmatpush1.bf16.msra.mxu0 0
        %1180 = vmatprep.subr.bf16.mxu0 0
        %1181 = vmatpush1.bf16.msra.mxu0 0
        %1182 = vmatprep.subr.bf16.mxu0 0
        %1183 = vmatpush1.bf16.msra.mxu0 0
        %1184 = vmatprep.subr.bf16.mxu0 0
        %1185 = vmatpush1.bf16.msra.mxu0 0
        %1186 = vmatprep.subr.bf16.mxu0 0
        %1187 = vmatpush1.bf16.msra.mxu0 0
        %1188 = vmatprep.mubr.bf16.mxu0 0
        %1189 = vmatmul.mubr.bf16.gmra.mrb[0].mxu0 %v1114
        %v1190 = vpop.f32.mrb[0].mxu0
        %v1191 = vadd.f32 0.0, %v1190
        %v1192 = vpop.f32.mrb[0].mxu0
        %v1193 = vadd.f32 0.0, %v1192
        %v1194 = vpop.f32.mrb[0].mxu0
        %v1195 = vpop.f32.mrb[0].mxu0
        %1196 = vdwg.mxu0
        %v1197 = vadd.f32 %v1110, %v1150
        %v1198 = vadd.f32 %v1111, %v1152
        %v1199 = vadd.f32 %v1112, %v1191
        %v1200 = vadd.f32 %v1113, %v1193
        %v1201 = vxor.u32 %v1197, 2147483648
        %v1202 = vmul.f32 %v1201, 1.442695
        %v1203 = vpow.pop %v1202
        %v1204 = vadd.f32 %v1203, 1.0
        %v1205 = vrcp.pop %v1204
        %v1206 = vmul.f32 1.0, %v1205
        %v1207 = vxor.u32 %v1198, 2147483648
        %v1208 = vmul.f32 %v1207, 1.442695
        %v1209 = vpow.pop %v1208
        %v1210 = vadd.f32 %v1209, 1.0
        %v1211 = vrcp.pop %v1210
        %v1212 = vmul.f32 1.0, %v1211
        %v1213 = vtanh.pop %v1199
        %v1214 = vxor.u32 %v1200, 2147483648
        %v1215 = vmul.f32 %v1214, 1.442695
        %v1216 = vpow.pop %v1215
        %v1217 = vadd.f32 %v1216, 1.0
        %v1218 = vrcp.pop %v1217
        %v1219 = vmul.f32 1.0, %v1218
        %v1220 = vmul.f32 %v1212, %v1098
        %v1221 = vmul.f32 %v1206, %v1213
        %v1222 = vadd.f32 %v1220, %v1221
        %v1223 = vtanh.pop %v1222
        %v1224 = vmul.f32 %v1219, %v1223
        %s1225 = scalar_lea.vmem [#allocation3], %s1104
        %1226 = vst [vmem:[%s1225] sm:$0xff] %v1224
        %s1227 = scalar_select %p571, 4, 3
        %s1228 = smul.u32 %s1227, 8
        %s1229 = sshra.s32 %s1228, 3
        %s1230 = sand.u32 %s1228, 7
        %s1231 = smul.u32 %s1229, 4
        %s1232 = smul.addr %s1231, 8
        %s1233 = scalar_lea.vmem [#allocation2], %s1232
        %v1234 = vld [vmem:[%s1233] sm:$0xff]
        %v1235 = vld [vmem:[%s1233 + $0x8] sm:$0xff]
        %v1236 = vld [vmem:[%s1233 + $0x10] sm:$0xff]
        %v1237 = vld [vmem:[%s1233 + $0x18] sm:$0xff]
        %v1238 = vpack.c.bf16 %v1224, %v1224
        %1239 = vmatprep.subr.bf16.mxu0 %v680
        %1240 = vmatpush1.bf16.msra.mxu0 %v679
        %1241 = vmatprep.subr.bf16.mxu0 %v684
        %1242 = vmatpush1.bf16.msra.mxu0 %v683
        %1243 = vmatprep.subr.bf16.mxu0 %v688
        %1244 = vmatpush1.bf16.msra.mxu0 %v687
        %1245 = vmatprep.subr.bf16.mxu0 %v692
        %1246 = vmatpush1.bf16.msra.mxu0 %v691
        %1247 = vmatprep.subr.bf16.mxu0 %v696
        %1248 = vmatpush1.bf16.msra.mxu0 %v695
        %1249 = vmatprep.subr.bf16.mxu0 %v700
        %1250 = vmatpush1.bf16.msra.mxu0 %v699
        %1251 = vmatprep.subr.bf16.mxu0 %v704
        %1252 = vmatpush1.bf16.msra.mxu0 %v703
        %1253 = vmatprep.subr.bf16.mxu0 %v708
        %1254 = vmatpush1.bf16.msra.mxu0 %v707
        %1255 = vmatprep.subr.bf16.mxu0 0
        %1256 = vmatpush1.bf16.msra.mxu0 0
        %1257 = vmatprep.subr.bf16.mxu0 0
        %1258 = vmatpush1.bf16.msra.mxu0 0
        %1259 = vmatprep.subr.bf16.mxu0 0
        %1260 = vmatpush1.bf16.msra.mxu0 0
        %1261 = vmatprep.subr.bf16.mxu0 0
        %1262 = vmatpush1.bf16.msra.mxu0 0
        %1263 = vmatprep.subr.bf16.mxu0 0
        %1264 = vmatpush1.bf16.msra.mxu0 0
        %1265 = vmatprep.subr.bf16.mxu0 0
        %1266 = vmatpush1.bf16.msra.mxu0 0
        %1267 = vmatprep.subr.bf16.mxu0 0
        %1268 = vmatpush1.bf16.msra.mxu0 0
        %1269 = vmatprep.subr.bf16.mxu0 0
        %1270 = vmatpush1.bf16.msra.mxu0 0
        %1271 = vmatprep.mubr.bf16.mxu0 0
        %1272 = vmatmul.mubr.bf16.gmra.mrb[0].mxu0 %v1238
        %v1273 = vpop.f32.mrb[0].mxu0
        %v1274 = vadd.f32 0.0, %v1273
        %v1275 = vpop.f32.mrb[0].mxu0
        %v1276 = vadd.f32 0.0, %v1275
        %v1277 = vpop.f32.mrb[0].mxu0
        %v1278 = vpop.f32.mrb[0].mxu0
        %1279 = vdwg.mxu0
        %1280 = vmatprep.subr.bf16.mxu0 %v682
        %1281 = vmatpush1.bf16.msra.mxu0 %v681
        %1282 = vmatprep.subr.bf16.mxu0 %v686
        %1283 = vmatpush1.bf16.msra.mxu0 %v685
        %1284 = vmatprep.subr.bf16.mxu0 %v690
        %1285 = vmatpush1.bf16.msra.mxu0 %v689
        %1286 = vmatprep.subr.bf16.mxu0 %v694
        %1287 = vmatpush1.bf16.msra.mxu0 %v693
        %1288 = vmatprep.subr.bf16.mxu0 %v698
        %1289 = vmatpush1.bf16.msra.mxu0 %v697
        %1290 = vmatprep.subr.bf16.mxu0 %v702
        %1291 = vmatpush1.bf16.msra.mxu0 %v701
        %1292 = vmatprep.subr.bf16.mxu0 %v706
        %1293 = vmatpush1.bf16.msra.mxu0 %v705
        %1294 = vmatprep.subr.bf16.mxu0 %v710
        %1295 = vmatpush1.bf16.msra.mxu0 %v709
        %1296 = vmatprep.subr.bf16.mxu0 0
        %1297 = vmatpush1.bf16.msra.mxu0 0
        %1298 = vmatprep.subr.bf16.mxu0 0
        %1299 = vmatpush1.bf16.msra.mxu0 0
        %1300 = vmatprep.subr.bf16.mxu0 0
        %1301 = vmatpush1.bf16.msra.mxu0 0
        %1302 = vmatprep.subr.bf16.mxu0 0
        %1303 = vmatpush1.bf16.msra.mxu0 0
        %1304 = vmatprep.subr.bf16.mxu0 0
        %1305 = vmatpush1.bf16.msra.mxu0 0
        %1306 = vmatprep.subr.bf16.mxu0 0
        %1307 = vmatpush1.bf16.msra.mxu0 0
        %1308 = vmatprep.subr.bf16.mxu0 0
        %1309 = vmatpush1.bf16.msra.mxu0 0
        %1310 = vmatprep.subr.bf16.mxu0 0
        %1311 = vmatpush1.bf16.msra.mxu0 0
        %1312 = vmatprep.mubr.bf16.mxu0 0
        %1313 = vmatmul.mubr.bf16.gmra.mrb[0].mxu0 %v1238
        %v1314 = vpop.f32.mrb[0].mxu0
        %v1315 = vadd.f32 0.0, %v1314
        %v1316 = vpop.f32.mrb[0].mxu0
        %v1317 = vadd.f32 0.0, %v1316
        %v1318 = vpop.f32.mrb[0].mxu0
        %v1319 = vpop.f32.mrb[0].mxu0
        %1320 = vdwg.mxu0
        %v1321 = vadd.f32 %v1234, %v1274
        %v1322 = vadd.f32 %v1235, %v1276
        %v1323 = vadd.f32 %v1236, %v1315
        %v1324 = vadd.f32 %v1237, %v1317
        %v1325 = vxor.u32 %v1321, 2147483648
        %v1326 = vmul.f32 %v1325, 1.442695
        %v1327 = vpow.pop %v1326
        %v1328 = vadd.f32 %v1327, 1.0
        %v1329 = vrcp.pop %v1328
        %v1330 = vmul.f32 1.0, %v1329
        %v1331 = vxor.u32 %v1322, 2147483648
        %v1332 = vmul.f32 %v1331, 1.442695
        %v1333 = vpow.pop %v1332
        %v1334 = vadd.f32 %v1333, 1.0
        %v1335 = vrcp.pop %v1334
        %v1336 = vmul.f32 1.0, %v1335
        %v1337 = vtanh.pop %v1323
        %v1338 = vxor.u32 %v1324, 2147483648
        %v1339 = vmul.f32 %v1338, 1.442695
        %v1340 = vpow.pop %v1339
        %v1341 = vadd.f32 %v1340, 1.0
        %v1342 = vrcp.pop %v1341
        %v1343 = vmul.f32 1.0, %v1342
        %v1344 = vmul.f32 %v1336, %v1222
        %v1345 = vmul.f32 %v1330, %v1337
        %v1346 = vadd.f32 %v1344, %v1345
        %v1347 = vtanh.pop %v1346
        %v1348 = vmul.f32 %v1343, %v1347
        %s1349 = scalar_lea.vmem [#allocation3], %s1228
        %1350 = vst [vmem:[%s1349] sm:$0xff] %v1348
        %s1351 = scalar_select %p571, 5, 2
        %s1352 = smul.u32 %s1351, 8
        %s1353 = sshra.s32 %s1352, 3
        %s1354 = sand.u32 %s1352, 7
        %s1355 = smul.u32 %s1353, 4
        %s1356 = smul.addr %s1355, 8
        %s1357 = scalar_lea.vmem [#allocation2], %s1356
        %v1358 = vld [vmem:[%s1357] sm:$0xff]
        %v1359 = vld [vmem:[%s1357 + $0x8] sm:$0xff]
        %v1360 = vld [vmem:[%s1357 + $0x10] sm:$0xff]
        %v1361 = vld [vmem:[%s1357 + $0x18] sm:$0xff]
        %v1362 = vpack.c.bf16 %v1348, %v1348
        %1363 = vmatprep.subr.bf16.mxu0 %v680
        %1364 = vmatpush1.bf16.msra.mxu0 %v679
        %1365 = vmatprep.subr.bf16.mxu0 %v684
        %1366 = vmatpush1.bf16.msra.mxu0 %v683
        %1367 = vmatprep.subr.bf16.mxu0 %v688
        %1368 = vmatpush1.bf16.msra.mxu0 %v687
        %1369 = vmatprep.subr.bf16.mxu0 %v692
        %1370 = vmatpush1.bf16.msra.mxu0 %v691
        %1371 = vmatprep.subr.bf16.mxu0 %v696
        %1372 = vmatpush1.bf16.msra.mxu0 %v695
        %1373 = vmatprep.subr.bf16.mxu0 %v700
        %1374 = vmatpush1.bf16.msra.mxu0 %v699
        %1375 = vmatprep.subr.bf16.mxu0 %v704
        %1376 = vmatpush1.bf16.msra.mxu0 %v703
        %1377 = vmatprep.subr.bf16.mxu0 %v708
        %1378 = vmatpush1.bf16.msra.mxu0 %v707
        %1379 = vmatprep.subr.bf16.mxu0 0
        %1380 = vmatpush1.bf16.msra.mxu0 0
        %1381 = vmatprep.subr.bf16.mxu0 0
        %1382 = vmatpush1.bf16.msra.mxu0 0
        %1383 = vmatprep.subr.bf16.mxu0 0
        %1384 = vmatpush1.bf16.msra.mxu0 0
        %1385 = vmatprep.subr.bf16.mxu0 0
        %1386 = vmatpush1.bf16.msra.mxu0 0
        %1387 = vmatprep.subr.bf16.mxu0 0
        %1388 = vmatpush1.bf16.msra.mxu0 0
        %1389 = vmatprep.subr.bf16.mxu0 0
        %1390 = vmatpush1.bf16.msra.mxu0 0
        %1391 = vmatprep.subr.bf16.mxu0 0
        %1392 = vmatpush1.bf16.msra.mxu0 0
        %1393 = vmatprep.subr.bf16.mxu0 0
        %1394 = vmatpush1.bf16.msra.mxu0 0
        %1395 = vmatprep.mubr.bf16.mxu0 0
        %1396 = vmatmul.mubr.bf16.gmra.mrb[0].mxu0 %v1362
        %v1397 = vpop.f32.mrb[0].mxu0
        %v1398 = vadd.f32 0.0, %v1397
        %v1399 = vpop.f32.mrb[0].mxu0
        %v1400 = vadd.f32 0.0, %v1399
        %v1401 = vpop.f32.mrb[0].mxu0
        %v1402 = vpop.f32.mrb[0].mxu0
        %1403 = vdwg.mxu0
        %1404 = vmatprep.subr.bf16.mxu0 %v682
        %1405 = vmatpush1.bf16.msra.mxu0 %v681
        %1406 = vmatprep.subr.bf16.mxu0 %v686
        %1407 = vmatpush1.bf16.msra.mxu0 %v685
        %1408 = vmatprep.subr.bf16.mxu0 %v690
        %1409 = vmatpush1.bf16.msra.mxu0 %v689
        %1410 = vmatprep.subr.bf16.mxu0 %v694
        %1411 = vmatpush1.bf16.msra.mxu0 %v693
        %1412 = vmatprep.subr.bf16.mxu0 %v698
        %1413 = vmatpush1.bf16.msra.mxu0 %v697
        %1414 = vmatprep.subr.bf16.mxu0 %v702
        %1415 = vmatpush1.bf16.msra.mxu0 %v701
        %1416 = vmatprep.subr.bf16.mxu0 %v706
        %1417 = vmatpush1.bf16.msra.mxu0 %v705
        %1418 = vmatprep.subr.bf16.mxu0 %v710
        %1419 = vmatpush1.bf16.msra.mxu0 %v709
        %1420 = vmatprep.subr.bf16.mxu0 0
        %1421 = vmatpush1.bf16.msra.mxu0 0
        %1422 = vmatprep.subr.bf16.mxu0 0
        %1423 = vmatpush1.bf16.msra.mxu0 0
        %1424 = vmatprep.subr.bf16.mxu0 0
        %1425 = vmatpush1.bf16.msra.mxu0 0
        %1426 = vmatprep.subr.bf16.mxu0 0
        %1427 = vmatpush1.bf16.msra.mxu0 0
        %1428 = vmatprep.subr.bf16.mxu0 0
        %1429 = vmatpush1.bf16.msra.mxu0 0
        %1430 = vmatprep.subr.bf16.mxu0 0
        %1431 = vmatpush1.bf16.msra.mxu0 0
        %1432 = vmatprep.subr.bf16.mxu0 0
        %1433 = vmatpush1.bf16.msra.mxu0 0
        %1434 = vmatprep.subr.bf16.mxu0 0
        %1435 = vmatpush1.bf16.msra.mxu0 0
        %1436 = vmatprep.mubr.bf16.mxu0 0
        %1437 = vmatmul.mubr.bf16.gmra.mrb[0].mxu0 %v1362
        %v1438 = vpop.f32.mrb[0].mxu0
        %v1439 = vadd.f32 0.0, %v1438
        %v1440 = vpop.f32.mrb[0].mxu0
        %v1441 = vadd.f32 0.0, %v1440
        %v1442 = vpop.f32.mrb[0].mxu0
        %v1443 = vpop.f32.mrb[0].mxu0
        %1444 = vdwg.mxu0
        %v1445 = vadd.f32 %v1358, %v1398
        %v1446 = vadd.f32 %v1359, %v1400
        %v1447 = vadd.f32 %v1360, %v1439
        %v1448 = vadd.f32 %v1361, %v1441
        %v1449 = vxor.u32 %v1445, 2147483648
        %v1450 = vmul.f32 %v1449, 1.442695
        %v1451 = vpow.pop %v1450
        %v1452 = vadd.f32 %v1451, 1.0
        %v1453 = vrcp.pop %v1452
        %v1454 = vmul.f32 1.0, %v1453
        %v1455 = vxor.u32 %v1446, 2147483648
        %v1456 = vmul.f32 %v1455, 1.442695
        %v1457 = vpow.pop %v1456
        %v1458 = vadd.f32 %v1457, 1.0
        %v1459 = vrcp.pop %v1458
        %v1460 = vmul.f32 1.0, %v1459
        %v1461 = vtanh.pop %v1447
        %v1462 = vxor.u32 %v1448, 2147483648
        %v1463 = vmul.f32 %v1462, 1.442695
        %v1464 = vpow.pop %v1463
        %v1465 = vadd.f32 %v1464, 1.0
        %v1466 = vrcp.pop %v1465
        %v1467 = vmul.f32 1.0, %v1466
        %v1468 = vmul.f32 %v1460, %v1346
        %v1469 = vmul.f32 %v1454, %v1461
        %v1470 = vadd.f32 %v1468, %v1469
        %v1471 = vtanh.pop %v1470
        %v1472 = vmul.f32 %v1467, %v1471
        %s1473 = scalar_lea.vmem [#allocation3], %s1352
        %1474 = vst [vmem:[%s1473] sm:$0xff] %v1472
        %s1475 = scalar_select %p571, 6, 1
        %s1476 = smul.u32 %s1475, 8
        %s1477 = sshra.s32 %s1476, 3
        %s1478 = sand.u32 %s1476, 7
        %s1479 = smul.u32 %s1477, 4
        %s1480 = smul.addr %s1479, 8
        %s1481 = scalar_lea.vmem [#allocation2], %s1480
        %v1482 = vld [vmem:[%s1481] sm:$0xff]
        %v1483 = vld [vmem:[%s1481 + $0x8] sm:$0xff]
        %v1484 = vld [vmem:[%s1481 + $0x10] sm:$0xff]
        %v1485 = vld [vmem:[%s1481 + $0x18] sm:$0xff]
        %v1486 = vpack.c.bf16 %v1472, %v1472
        %1487 = vmatprep.subr.bf16.mxu0 %v680
        %1488 = vmatpush1.bf16.msra.mxu0 %v679
        %1489 = vmatprep.subr.bf16.mxu0 %v684
        %1490 = vmatpush1.bf16.msra.mxu0 %v683
        %1491 = vmatprep.subr.bf16.mxu0 %v688
        %1492 = vmatpush1.bf16.msra.mxu0 %v687
        %1493 = vmatprep.subr.bf16.mxu0 %v692
        %1494 = vmatpush1.bf16.msra.mxu0 %v691
        %1495 = vmatprep.subr.bf16.mxu0 %v696
        %1496 = vmatpush1.bf16.msra.mxu0 %v695
        %1497 = vmatprep.subr.bf16.mxu0 %v700
        %1498 = vmatpush1.bf16.msra.mxu0 %v699
        %1499 = vmatprep.subr.bf16.mxu0 %v704
        %1500 = vmatpush1.bf16.msra.mxu0 %v703
        %1501 = vmatprep.subr.bf16.mxu0 %v708
        %1502 = vmatpush1.bf16.msra.mxu0 %v707
        %1503 = vmatprep.subr.bf16.mxu0 0
        %1504 = vmatpush1.bf16.msra.mxu0 0
        %1505 = vmatprep.subr.bf16.mxu0 0
        %1506 = vmatpush1.bf16.msra.mxu0 0
        %1507 = vmatprep.subr.bf16.mxu0 0
        %1508 = vmatpush1.bf16.msra.mxu0 0
        %1509 = vmatprep.subr.bf16.mxu0 0
        %1510 = vmatpush1.bf16.msra.mxu0 0
        %1511 = vmatprep.subr.bf16.mxu0 0
        %1512 = vmatpush1.bf16.msra.mxu0 0
        %1513 = vmatprep.subr.bf16.mxu0 0
        %1514 = vmatpush1.bf16.msra.mxu0 0
        %1515 = vmatprep.subr.bf16.mxu0 0
        %1516 = vmatpush1.bf16.msra.mxu0 0
        %1517 = vmatprep.subr.bf16.mxu0 0
        %1518 = vmatpush1.bf16.msra.mxu0 0
        %1519 = vmatprep.mubr.bf16.mxu0 0
        %1520 = vmatmul.mubr.bf16.gmra.mrb[0].mxu0 %v1486
        %v1521 = vpop.f32.mrb[0].mxu0
        %v1522 = vadd.f32 0.0, %v1521
        %v1523 = vpop.f32.mrb[0].mxu0
        %v1524 = vadd.f32 0.0, %v1523
        %v1525 = vpop.f32.mrb[0].mxu0
        %v1526 = vpop.f32.mrb[0].mxu0
        %1527 = vdwg.mxu0
        %1528 = vmatprep.subr.bf16.mxu0 %v682
        %1529 = vmatpush1.bf16.msra.mxu0 %v681
        %1530 = vmatprep.subr.bf16.mxu0 %v686
        %1531 = vmatpush1.bf16.msra.mxu0 %v685
        %1532 = vmatprep.subr.bf16.mxu0 %v690
        %1533 = vmatpush1.bf16.msra.mxu0 %v689
        %1534 = vmatprep.subr.bf16.mxu0 %v694
        %1535 = vmatpush1.bf16.msra.mxu0 %v693
        %1536 = vmatprep.subr.bf16.mxu0 %v698
        %1537 = vmatpush1.bf16.msra.mxu0 %v697
        %1538 = vmatprep.subr.bf16.mxu0 %v702
        %1539 = vmatpush1.bf16.msra.mxu0 %v701
        %1540 = vmatprep.subr.bf16.mxu0 %v706
        %1541 = vmatpush1.bf16.msra.mxu0 %v705
        %1542 = vmatprep.subr.bf16.mxu0 %v710
        %1543 = vmatpush1.bf16.msra.mxu0 %v709
        %1544 = vmatprep.subr.bf16.mxu0 0
        %1545 = vmatpush1.bf16.msra.mxu0 0
        %1546 = vmatprep.subr.bf16.mxu0 0
        %1547 = vmatpush1.bf16.msra.mxu0 0
        %1548 = vmatprep.subr.bf16.mxu0 0
        %1549 = vmatpush1.bf16.msra.mxu0 0
        %1550 = vmatprep.subr.bf16.mxu0 0
        %1551 = vmatpush1.bf16.msra.mxu0 0
        %1552 = vmatprep.subr.bf16.mxu0 0
        %1553 = vmatpush1.bf16.msra.mxu0 0
        %1554 = vmatprep.subr.bf16.mxu0 0
        %1555 = vmatpush1.bf16.msra.mxu0 0
        %1556 = vmatprep.subr.bf16.mxu0 0
        %1557 = vmatpush1.bf16.msra.mxu0 0
        %1558 = vmatprep.subr.bf16.mxu0 0
        %1559 = vmatpush1.bf16.msra.mxu0 0
        %1560 = vmatprep.mubr.bf16.mxu0 0
        %1561 = vmatmul.mubr.bf16.gmra.mrb[0].mxu0 %v1486
        %v1562 = vpop.f32.mrb[0].mxu0
        %v1563 = vadd.f32 0.0, %v1562
        %v1564 = vpop.f32.mrb[0].mxu0
        %v1565 = vadd.f32 0.0, %v1564
        %v1566 = vpop.f32.mrb[0].mxu0
        %v1567 = vpop.f32.mrb[0].mxu0
        %1568 = vdwg.mxu0
        %v1569 = vadd.f32 %v1482, %v1522
        %v1570 = vadd.f32 %v1483, %v1524
        %v1571 = vadd.f32 %v1484, %v1563
        %v1572 = vadd.f32 %v1485, %v1565
        %v1573 = vxor.u32 %v1569, 2147483648
        %v1574 = vmul.f32 %v1573, 1.442695
        %v1575 = vpow.pop %v1574
        %v1576 = vadd.f32 %v1575, 1.0
        %v1577 = vrcp.pop %v1576
        %v1578 = vmul.f32 1.0, %v1577
        %v1579 = vxor.u32 %v1570, 2147483648
        %v1580 = vmul.f32 %v1579, 1.442695
        %v1581 = vpow.pop %v1580
        %v1582 = vadd.f32 %v1581, 1.0
        %v1583 = vrcp.pop %v1582
        %v1584 = vmul.f32 1.0, %v1583
        %v1585 = vtanh.pop %v1571
        %v1586 = vxor.u32 %v1572, 2147483648
        %v1587 = vmul.f32 %v1586, 1.442695
        %v1588 = vpow.pop %v1587
        %v1589 = vadd.f32 %v1588, 1.0
        %v1590 = vrcp.pop %v1589
        %v1591 = vmul.f32 1.0, %v1590
        %v1592 = vmul.f32 %v1584, %v1470
        %v1593 = vmul.f32 %v1578, %v1585
        %v1594 = vadd.f32 %v1592, %v1593
        %v1595 = vtanh.pop %v1594
        %v1596 = vmul.f32 %v1591, %v1595
        %s1597 = scalar_lea.vmem [#allocation3], %s1476
        %1598 = vst [vmem:[%s1597] sm:$0xff] %v1596
        %s1599 = scalar_select %p571, 7, 0
        %s1600 = smul.u32 %s1599, 8
        %s1601 = sshra.s32 %s1600, 3
        %s1602 = sand.u32 %s1600, 7
        %s1603 = smul.u32 %s1601, 4
        %s1604 = smul.addr %s1603, 8
        %s1605 = scalar_lea.vmem [#allocation2], %s1604
        %v1606 = vld [vmem:[%s1605] sm:$0xff]
        %v1607 = vld [vmem:[%s1605 + $0x8] sm:$0xff]
        %v1608 = vld [vmem:[%s1605 + $0x10] sm:$0xff]
        %v1609 = vld [vmem:[%s1605 + $0x18] sm:$0xff]
        %v1610 = vpack.c.bf16 %v1596, %v1596
        %1611 = vmatprep.subr.bf16.mxu0 %v680
        %1612 = vmatpush1.bf16.msra.mxu0 %v679
        %1613 = vmatprep.subr.bf16.mxu0 %v684
        %1614 = vmatpush1.bf16.msra.mxu0 %v683
        %1615 = vmatprep.subr.bf16.mxu0 %v688
        %1616 = vmatpush1.bf16.msra.mxu0 %v687
        %1617 = vmatprep.subr.bf16.mxu0 %v692
        %1618 = vmatpush1.bf16.msra.mxu0 %v691
        %1619 = vmatprep.subr.bf16.mxu0 %v696
        %1620 = vmatpush1.bf16.msra.mxu0 %v695
        %1621 = vmatprep.subr.bf16.mxu0 %v700
        %1622 = vmatpush1.bf16.msra.mxu0 %v699
        %1623 = vmatprep.subr.bf16.mxu0 %v704
        %1624 = vmatpush1.bf16.msra.mxu0 %v703
        %1625 = vmatprep.subr.bf16.mxu0 %v708
        %1626 = vmatpush1.bf16.msra.mxu0 %v707
        %1627 = vmatprep.subr.bf16.mxu0 0
        %1628 = vmatpush1.bf16.msra.mxu0 0
        %1629 = vmatprep.subr.bf16.mxu0 0
        %1630 = vmatpush1.bf16.msra.mxu0 0
        %1631 = vmatprep.subr.bf16.mxu0 0
        %1632 = vmatpush1.bf16.msra.mxu0 0
        %1633 = vmatprep.subr.bf16.mxu0 0
        %1634 = vmatpush1.bf16.msra.mxu0 0
        %1635 = vmatprep.subr.bf16.mxu0 0
        %1636 = vmatpush1.bf16.msra.mxu0 0
        %1637 = vmatprep.subr.bf16.mxu0 0
        %1638 = vmatpush1.bf16.msra.mxu0 0
        %1639 = vmatprep.subr.bf16.mxu0 0
        %1640 = vmatpush1.bf16.msra.mxu0 0
        %1641 = vmatprep.subr.bf16.mxu0 0
        %1642 = vmatpush1.bf16.msra.mxu0 0
        %1643 = vmatprep.mubr.bf16.mxu0 0
        %1644 = vmatmul.mubr.bf16.gmra.mrb[0].mxu0 %v1610
        %v1645 = vpop.f32.mrb[0].mxu0
        %v1646 = vadd.f32 0.0, %v1645
        %v1647 = vpop.f32.mrb[0].mxu0
        %v1648 = vadd.f32 0.0, %v1647
        %v1649 = vpop.f32.mrb[0].mxu0
        %v1650 = vpop.f32.mrb[0].mxu0
        %1651 = vdwg.mxu0
        %1652 = vmatprep.subr.bf16.mxu0 %v682
        %1653 = vmatpush1.bf16.msra.mxu0 %v681
        %1654 = vmatprep.subr.bf16.mxu0 %v686
        %1655 = vmatpush1.bf16.msra.mxu0 %v685
        %1656 = vmatprep.subr.bf16.mxu0 %v690
        %1657 = vmatpush1.bf16.msra.mxu0 %v689
        %1658 = vmatprep.subr.bf16.mxu0 %v694
        %1659 = vmatpush1.bf16.msra.mxu0 %v693
        %1660 = vmatprep.subr.bf16.mxu0 %v698
        %1661 = vmatpush1.bf16.msra.mxu0 %v697
        %1662 = vmatprep.subr.bf16.mxu0 %v702
        %1663 = vmatpush1.bf16.msra.mxu0 %v701
        %1664 = vmatprep.subr.bf16.mxu0 %v706
        %1665 = vmatpush1.bf16.msra.mxu0 %v705
        %1666 = vmatprep.subr.bf16.mxu0 %v710
        %1667 = vmatpush1.bf16.msra.mxu0 %v709
        %1668 = vmatprep.subr.bf16.mxu0 0
        %1669 = vmatpush1.bf16.msra.mxu0 0
        %1670 = vmatprep.subr.bf16.mxu0 0
        %1671 = vmatpush1.bf16.msra.mxu0 0
        %1672 = vmatprep.subr.bf16.mxu0 0
        %1673 = vmatpush1.bf16.msra.mxu0 0
        %1674 = vmatprep.subr.bf16.mxu0 0
        %1675 = vmatpush1.bf16.msra.mxu0 0
        %1676 = vmatprep.subr.bf16.mxu0 0
        %1677 = vmatpush1.bf16.msra.mxu0 0
        %1678 = vmatprep.subr.bf16.mxu0 0
        %1679 = vmatpush1.bf16.msra.mxu0 0
        %1680 = vmatprep.subr.bf16.mxu0 0
        %1681 = vmatpush1.bf16.msra.mxu0 0
        %1682 = vmatprep.subr.bf16.mxu0 0
        %1683 = vmatpush1.bf16.msra.mxu0 0
        %1684 = vmatprep.mubr.bf16.mxu0 0
        %1685 = vmatmul.mubr.bf16.gmra.mrb[0].mxu0 %v1610
        %v1686 = vpop.f32.mrb[0].mxu0
        %v1687 = vadd.f32 0.0, %v1686
        %v1688 = vpop.f32.mrb[0].mxu0
        %v1689 = vadd.f32 0.0, %v1688
        %v1690 = vpop.f32.mrb[0].mxu0
        %v1691 = vpop.f32.mrb[0].mxu0
        %1692 = vdwg.mxu0
        %v1693 = vadd.f32 %v1606, %v1646
        %v1694 = vadd.f32 %v1607, %v1648
        %v1695 = vadd.f32 %v1608, %v1687
        %v1696 = vadd.f32 %v1609, %v1689
        %v1697 = vxor.u32 %v1693, 2147483648
        %v1698 = vmul.f32 %v1697, 1.442695
        %v1699 = vpow.pop %v1698
        %v1700 = vadd.f32 %v1699, 1.0
        %v1701 = vrcp.pop %v1700
        %v1702 = vmul.f32 1.0, %v1701
        %v1703 = vxor.u32 %v1694, 2147483648
        %v1704 = vmul.f32 %v1703, 1.442695
        %v1705 = vpow.pop %v1704
        %v1706 = vadd.f32 %v1705, 1.0
        %v1707 = vrcp.pop %v1706
        %v1708 = vmul.f32 1.0, %v1707
        %v1709 = vtanh.pop %v1695
        %v1710 = vxor.u32 %v1696, 2147483648
        %v1711 = vmul.f32 %v1710, 1.442695
        %v1712 = vpow.pop %v1711
        %v1713 = vadd.f32 %v1712, 1.0
        %v1714 = vrcp.pop %v1713
        %v1715 = vmul.f32 1.0, %v1714
        %v1716 = vmul.f32 %v1708, %v1594
        %v1717 = vmul.f32 %v1702, %v1709
        %v1718 = vadd.f32 %v1716, %v1717
        %v1719 = vtanh.pop %v1718
        %v1720 = vmul.f32 %v1715, %v1719
        %s1721 = scalar_lea.vmem [#allocation3], %s1600
        %1722 = vst [vmem:[%s1721] sm:$0xff] %v1720
        %v1723 = vld [vmem:[#allocation3] sm:$0xff]
        %v1724 = vld [vmem:[#allocation3 + $0x8] sm:$0xff]
        %v1725 = vld [vmem:[#allocation3 + $0x10] sm:$0xff]
        %v1726 = vld [vmem:[#allocation3 + $0x18] sm:$0xff]
        %v1727 = vld [vmem:[#allocation3 + $0x20] sm:$0xff]
        %v1728 = vld [vmem:[#allocation3 + $0x28] sm:$0xff]
        %v1729 = vld [vmem:[#allocation3 + $0x30] sm:$0xff]
        %v1730 = vld [vmem:[#allocation3 + $0x38] sm:$0xff]
        %v1731 = vpack.c.bf16 %v1724, %v1723
        %v1732 = vpack.c.bf16 %v1726, %v1725
        %v1733 = vpack.c.bf16 %v1728, %v1727
        %v1734 = vpack.c.bf16 %v1730, %v1729
        %v1739 = vunpack.c.l.b16 %v1731
        %v1740 = vunpack.c.h.b16 %v1731
        %v1741 = vunpack.c.l.b16 %v1732
        %v1742 = vunpack.c.h.b16 %v1732
        %v1743 = vunpack.c.l.b16 %v1733
        %v1744 = vunpack.c.h.b16 %v1733
        %v1745 = vunpack.c.l.b16 %v1734
        %v1746 = vunpack.c.h.b16 %v1734
        %v1747 = vpack.c.b16 %v1739, %v1739
        %v1748 = vpack.c.b16 %v1740, %v1740
        %v1749 = vpack.c.b16 %v1741, %v1741
        %v1750 = vpack.c.b16 %v1742, %v1742
        %v1751 = vpack.c.b16 %v1743, %v1743
        %v1752 = vpack.c.b16 %v1744, %v1744
        %v1753 = vpack.c.b16 %v1745, %v1745
        %v1754 = vpack.c.b16 %v1746, %v1746
        %1763 = vst [vmem:[%s268] sm:$0xf] %v1747
        %1764 = vst [vmem:[%s268 + $0x4] sm:$0xf] %v1748
        %1765 = vst [vmem:[%s268 + $0x8] sm:$0xf] %v1749
        %1766 = vst [vmem:[%s268 + $0xc] sm:$0xf] %v1750
        %1767 = vst [vmem:[%s268 + $0x10] sm:$0xf] %v1751
        %1768 = vst [vmem:[%s268 + $0x14] sm:$0xf] %v1752
        %1769 = vst [vmem:[%s268 + $0x18] sm:$0xf] %v1753
        %1770 = vst [vmem:[%s268 + $0x1c] sm:$0xf] %v1754
        %s1771 = sand.u32 %s131, 1
        %s1772 = scalar_lea.sflag [#allocation6], %s1771
        %s1773 = sand.u32 %s131, 1
        %s1774 = smul.addr %s1773, 32
        %s1775 = scalar_lea.vmem [#allocation9], %s1774
        // Predicated region
        $region45: #{tpu_custom_call.1} parent=35 // pred_check
          %p1776 = pneg %p141
        $region46: #{tpu_custom_call.1} parent=35 // pred_check_branch
          %1778 = sbr.rel (%p1776) target = $region48
        $region47: #{tpu_custom_call.1} parent=35 // pred_region
          %s1780 = ssub.s32 512, 512
          %1781 = vsyncadd %s1772, %s1780
          %s1782 = smul.addr %s24, 64
          %s1783 = scalar_lea.hbm %s4, %s1782
          %s1784 = sshll.u32 %s1775, 4
          %s1785 = int_to_ptr.vmem [resolvable:$true] %s1784
          %1790 = dma.vmem_to_hbm [thread:$0]  %s1785, 512, %s1783, %s1772, 64, 128, 4
        $region48: #{tpu_custom_call.1} parent=35 // pred_fallthru
          _
      $region36: #{tpu_custom_call.1} parent=5 // pred_fallthru
        _
      %p1791 = scmp.le.s32.totalorder 2, %s19
      // Predicated region
      $region49: #{tpu_custom_call.1} parent=5 // pred_check
        %p1792 = pneg %p1791
      $region50: #{tpu_custom_call.1} parent=5 // pred_check_branch
        %1794 = sbr.rel (%p1792) target = $region52
      $region51: #{tpu_custom_call.1} parent=5 // pred_region
        %s1795 = ssub.s32 %s19, 2
        // Predicated region
        $region53: #{tpu_custom_call.1} parent=51 // pred_check
          %p1796 = pneg %p147
        $region54: #{tpu_custom_call.1} parent=51 // pred_check_branch
          %1798 = sbr.rel (%p1796) target = $region56
        $region55: #{tpu_custom_call.1} parent=51 // pred_region
          %s1799 = sand.u32 %s132, 1
          %s1800 = scalar_lea.sflag [#allocation6], %s1799
          %s1801 = sand.u32 %s132, 1
          %s1802 = smul.addr %s1801, 32
          %s1803 = scalar_lea.vmem [#allocation9], %s1802
          %1804 = dma.done %s1800, 512
        $region56: #{tpu_custom_call.1} parent=51 // pred_fallthru
          _
      $region52: #{tpu_custom_call.1} parent=5 // pred_fallthru
        _
    $region6: #{tpu_custom_call.1} parent=1 // loop_footer
      %s23 = sadd.s32 1, %s19
    $region7: #{tpu_custom_call.1} parent=1 // loop_footer_branch
      %18 = sbr.rel target = $region3
    $region8: #{tpu_custom_call.1} parent=1 // loop_exit
      _
    %1805 = vsyncpa [#allocation5], 1
    %s1806 = scalar_lea.sflag [#allocation5], 1
    %1807 = vsyncpa %s1806, 1
    %1808 = vsyncpa [#allocation8], 1
    %s1809 = scalar_lea.sflag [#allocation8], 1
    %1810 = vsyncpa %s1809, 1
    %1811 = vsyncpa [#allocation6], 1
    %s1812 = scalar_lea.sflag [#allocation6], 1
    %1813 = vsyncpa %s1812, 1

</llo_original>
